<compile_context>
chip_gen: v7x
topology: tpu7x:2x2x1
jax: 0.10.0
libtpu: 0.0.40
codegen_flags: <defaults>
</compile_context>

<pallas_src>
import jax
import jax.numpy as jnp
import numpy as np
from jax.experimental import pallas as pl
from jax.experimental.pallas import tpu as pltpu

_OUT_SUB, _OUT_LANE = 8, 128  # aligned (8,128) output tile -> unmasked stores


def _l1_grad_loss_kernel(gen_ref, ir_ref, vi_ref, out_ref):
    TB, H, W = gen_ref.shape

    gen = gen_ref[...].astype(jnp.float32)
    ir = ir_ref[...].astype(jnp.float32)
    vi = vi_ref[...].astype(jnp.float32)

    # ---------------- intensity term ----------------
    sum_in = jnp.sum(jnp.abs(jnp.maximum(vi, ir) - gen))

    # Zero-padding boundary masks, hoisted once and broadcast over TB planes.
    rows = jax.lax.broadcasted_iota(jnp.int32, (H, W), 0)
    cols = jax.lax.broadcasted_iota(jnp.int32, (H, W), 1)
    not_top = (rows > 0).astype(jnp.float32)        # kill wrap at row 0
    not_bot = (rows < H - 1).astype(jnp.float32)    # kill wrap at row H-1
    not_left = (cols > 0).astype(jnp.float32)       # kill wrap at col 0
    not_right = (cols < W - 1).astype(jnp.float32)  # kill wrap at col W-1

    def sobel_abs(x):
        # Horizontal taps: lane rolls (XLU) + masks; shifted values are shared
        # between the [-1,0,1] and [1,2,1] passes.
        xm1 = pltpu.roll(x, shift=1, axis=2) * not_left       # x[:, :, j-1]
        xp1 = pltpu.roll(x, shift=W - 1, axis=2) * not_right  # x[:, :, j+1]
        d = xp1 - xm1                     # [-1, 0, 1]
        s = xm1 + 2.0 * x + xp1           # [ 1, 2, 1]
        # Vertical taps: sublane rolls (XLU) + masks.
        d_up = pltpu.roll(d, shift=1, axis=1) * not_top       # d[:, i-1, :]
        d_dn = pltpu.roll(d, shift=H - 1, axis=1) * not_bot   # d[:, i+1, :]
        s_up = pltpu.roll(s, shift=1, axis=1) * not_top
        s_dn = pltpu.roll(s, shift=H - 1, axis=1) * not_bot
        gx = d_up + 2.0 * d + d_dn        # [1, 2, 1]^T applied to d
        gy = s_up - s_dn                  # [1, 0,-1]^T applied to s
        return jnp.abs(gx) + jnp.abs(gy)

    # ---------------- gradient term ----------------
    # Order chosen so both single-image sobel fields are freed by the max
    # before sobel(gen) is materialized (smaller peak live set).
    g_joint = jnp.maximum(sobel_abs(vi), sobel_abs(ir))
    sum_grad = jnp.sum(jnp.abs(g_joint - sobel_abs(gen)))

    # One aligned, lane-dense (1, 8, 128) tile carrying both partial sums
    # (sum_in at [0,0,0], sum_grad at [0,0,1]).
    r = jax.lax.broadcasted_iota(jnp.int32, (1, _OUT_SUB, _OUT_LANE), 1)
    c = jax.lax.broadcasted_iota(jnp.int32, (1, _OUT_SUB, _OUT_LANE), 2)
    vals = jnp.where(c == 0, sum_in, sum_grad)
    out_ref[...] = jnp.where((r == 0) & (c < 2), vals, 0.0)


def _vmem_capacity_bytes():
    try:
        info = pltpu.get_tpu_info()
        cap = getattr(info, "vmem_capacity_bytes", None)
        if cap:
            return int(cap)
    except Exception:
        pass
    return 64 * 1024 * 1024  # conservative fallback (v7x per-core VMEM)


def l1_grad_loss_forward(generate_img, image_ir, image_vis, *, plane_tile=None):
    """Returns (loss_in, loss_grad) matching the PyTorch l1_grad_loss module.

    Inputs are NCHW with C == 1 (Sobelxy uses a (1,1,3,3) conv weight).
    f32 or bf16 inputs are accepted; all arithmetic is f32 inside the kernel.
    Note: W >= 128 (multiple of 128) is the lane-efficient path; smaller W is
    still correct but underutilizes the VPU lanes.
    """
    B, C, H, W = generate_img.shape
    assert image_ir.shape == (B, C, H, W) and image_vis.shape == (B, C, H, W)
    BC = B * C

    # --- generation-aware VMEM budget (v5e/v6e: 128 MiB, v7x: 64 MiB) ---
    vmem_cap = _vmem_capacity_bytes()
    in_item = np.dtype(generate_img.dtype).itemsize
    # 3 inputs x 2 pipeline buffers (input dtype) + ~12 live f32 block-sized
    # Sobel intermediates materialized inside the body.
    per_plane_bytes = H * W * (3 * 2 * in_item + 12 * 4)
    vmem_budget = int(vmem_cap * 0.55)  # headroom for compiler scratch
    max_tb = max(1, vmem_budget // per_plane_bytes)

    # Keep >= 2 grid steps so DMA double-buffering stays alive and both v7x
    # TensorCores get work, instead of collapsing small inputs to one step.
    TB = max(1, min(max_tb, -(-BC // 2))) if BC > 1 else 1
    if plane_tile is not None:
        TB = max(1, min(TB, plane_tile))
    num_steps = -(-BC // TB)
    BC_pad = num_steps * TB

    def prep(x):
        x = x.reshape(BC, H, W)
        if BC_pad != BC:
            # Zero planes contribute exactly 0 to both sums (we divide by the
            # true element count), so plane-axis padding is loss-neutral.
            x = jnp.pad(x, ((0, BC_pad - BC), (0, 0), (0, 0)))
        return x

    gen_p, ir_p, vi_p = prep(generate_img), prep(image_ir), prep(image_vis)

    img_spec = pl.BlockSpec((TB, H, W), lambda i: (i, 0, 0))

    sums = pl.pallas_call(
        _l1_grad_loss_kernel,
        out_shape=jax.ShapeDtypeStruct((num_steps, _OUT_SUB, _OUT_LANE),
                                       jnp.float32),
        grid=(num_steps,),
        in_specs=[img_spec, img_spec, img_spec],
        out_specs=pl.BlockSpec((1, _OUT_SUB, _OUT_LANE), lambda i: (i, 0, 0)),
        compiler_params=pltpu.CompilerParams(
            dimension_semantics=("parallel",),  # independent plane batches
            vmem_limit_bytes=int(min(vmem_cap * 0.8, 100 * 2**20)),
        ),
    )(gen_p, ir_p, vi_p)

    denom = float(B * C * H * W)
    loss_in = jnp.sum(sums[:, 0, 0]) / denom
    loss_grad = jnp.sum(sums[:, 0, 1]) / denom
    return loss_in, loss_grad


# ----------------------------- reference (check) -----------------------------
def _sobel_abs_ref(x):
    # Direct (non-separable) 3x3 cross-correlation with zero padding, NCHW.
    kx = np.array([[-1, 0, 1], [-2, 0, 2], [-1, 0, 1]], np.float32)
    ky = np.array([[1, 2, 1], [0, 0, 0], [-1, -2, -1]], np.float32)
    H, W = x.shape[-2:]
    xp = jnp.pad(x, ((0, 0), (0, 0), (1, 1), (1, 1)))
    sx = jnp.zeros_like(x)
    sy = jnp.zeros_like(x)
    for i in range(3):
        for j in range(3):
            win = xp[..., i:i + H, j:j + W]
            sx = sx + float(kx[i, j]) * win
            sy = sy + float(ky[i, j]) * win
    return jnp.abs(sx) + jnp.abs(sy)


def _l1_grad_loss_ref(gen, ir, vis):
    loss_in = jnp.mean(jnp.abs(jnp.maximum(vis, ir) - gen))
    loss_grad = jnp.mean(
        jnp.abs(jnp.maximum(_sobel_abs_ref(vis), _sobel_abs_ref(ir))
                - _sobel_abs_ref(gen)))
    return loss_in, loss_grad


if __name__ == "__main__":
    key = jax.random.PRNGKey(0)
    k1, k2, k3 = jax.random.split(key, 3)
    # Sobelxy uses a (1,1,3,3) conv weight => single-channel images.
    # 128x128 keeps the lane dimension full (see note in l1_grad_loss_forward).
    B, C, H, W = 2, 1, 128, 128
    generate_img = jax.random.uniform(k1, (B, C, H, W), dtype=jnp.float32)
    image_ir = jax.random.uniform(k2, (B, C, H, W), dtype=jnp.float32)
    image_vis = jax.random.uniform(k3, (B, C, H, W), dtype=jnp.float32)

    loss_in, loss_grad = l1_grad_loss_forward(generate_img, image_ir, image_vis)
    jax.block_until_ready((loss_in, loss_grad))

    ref_in, ref_grad = _l1_grad_loss_ref(generate_img, image_ir, image_vis)
    assert np.allclose(np.asarray(loss_in), np.asarray(ref_in),
                       rtol=1e-5, atol=1e-5), (loss_in, ref_in)
    assert np.allclose(np.asarray(loss_grad), np.asarray(ref_grad),
                       rtol=1e-5, atol=1e-5), (loss_grad, ref_grad)

    print("KERNEL_OK")
</pallas_src>

<mosaic_0001>
module attributes {stable_mosaic.version = 11 : i64} {
  func.func @_l1_grad_loss_kernel(%arg0: i32, %arg1: memref<1x128x128xf32, #tpu.memory_space<vmem>>, %arg2: memref<1x128x128xf32, #tpu.memory_space<vmem>>, %arg3: memref<1x128x128xf32, #tpu.memory_space<vmem>>, %arg4: memref<1x8x128xf32, #tpu.memory_space<vmem>>) attributes {dimension_semantics = [#tpu.dimension_semantics<parallel>], iteration_bounds = array<i64: 2>, scalar_prefetch = 0 : i64, scratch_operands = 0 : i64, tpu.core_type = #tpu.core_type<tc>, window_params = [{transform_indices = @transform_0, window_bounds = array<i64: 1, 128, 128>}, {transform_indices = @transform_1, window_bounds = array<i64: 1, 128, 128>}, {transform_indices = @transform_2, window_bounds = array<i64: 1, 128, 128>}, {transform_indices = @transform_3, window_bounds = array<i64: 1, 8, 128>}]} {
    %c0 = arith.constant 0 : index
    %c0_0 = arith.constant 0 : index
    %c0_1 = arith.constant 0 : index
    %0 = vector.load %arg1[%c0, %c0_0, %c0_1] : memref<1x128x128xf32, #tpu.memory_space<vmem>>, vector<1x128x128xf32>
    %c0_2 = arith.constant 0 : index
    %c0_3 = arith.constant 0 : index
    %c0_4 = arith.constant 0 : index
    %1 = vector.load %arg2[%c0_2, %c0_3, %c0_4] : memref<1x128x128xf32, #tpu.memory_space<vmem>>, vector<1x128x128xf32>
    %c0_5 = arith.constant 0 : index
    %c0_6 = arith.constant 0 : index
    %c0_7 = arith.constant 0 : index
    %2 = vector.load %arg3[%c0_5, %c0_6, %c0_7] : memref<1x128x128xf32, #tpu.memory_space<vmem>>, vector<1x128x128xf32>
    %3 = arith.maximumf %2, %1 : vector<1x128x128xf32>
    %4 = arith.subf %3, %0 : vector<1x128x128xf32>
    %5 = math.absf %4 : vector<1x128x128xf32>
    %6 = vector.shape_cast %5 : vector<1x128x128xf32> to vector<1x1x128x128xf32>
    %cst = arith.constant dense<0.000000e+00> : vector<1xf32>
    %7 = vector.multi_reduction <add>, %6, %cst [1, 2, 3] : vector<1x1x128x128xf32> to vector<1xf32>
    %8 = vector.shape_cast %7 : vector<1xf32> to vector<1x1x1x1xf32>
    %9 = vector.extract %8[0, 0, 0, 0] : f32 from vector<1x1x1x1xf32>
    %10 = tpu.iota {dimensions = array<i32: 0>} : vector<128x128xi32>
    %11 = tpu.iota {dimensions = array<i32: 1>} : vector<128x128xi32>
    %c0_i32 = arith.constant 0 : i32
    %12 = vector.broadcast %c0_i32 : i32 to vector<128x128xi32>
    %13 = arith.cmpi sgt, %10, %12 : vector<128x128xi32>
    %14 = arith.extui %13 : vector<128x128xi1> to vector<128x128xi32>
    %15 = arith.sitofp %14 : vector<128x128xi32> to vector<128x128xf32>
    %c127_i32 = arith.constant 127 : i32
    %16 = vector.broadcast %c127_i32 : i32 to vector<128x128xi32>
    %17 = arith.cmpi slt, %10, %16 : vector<128x128xi32>
    %18 = arith.extui %17 : vector<128x128xi1> to vector<128x128xi32>
    %19 = arith.sitofp %18 : vector<128x128xi32> to vector<128x128xf32>
    %c0_i32_8 = arith.constant 0 : i32
    %20 = vector.broadcast %c0_i32_8 : i32 to vector<128x128xi32>
    %21 = arith.cmpi sgt, %11, %20 : vector<128x128xi32>
    %22 = arith.extui %21 : vector<128x128xi1> to vector<128x128xi32>
    %23 = arith.sitofp %22 : vector<128x128xi32> to vector<128x128xf32>
    %c127_i32_9 = arith.constant 127 : i32
    %24 = vector.broadcast %c127_i32_9 : i32 to vector<128x128xi32>
    %25 = arith.cmpi slt, %11, %24 : vector<128x128xi32>
    %26 = arith.extui %25 : vector<128x128xi1> to vector<128x128xi32>
    %27 = arith.sitofp %26 : vector<128x128xi32> to vector<128x128xf32>
    %c1_i32 = arith.constant 1 : i32
    %28 = tpu.dynamic_rotate %2 by %c1_i32 dim 2 : vector<1x128x128xf32>, i32 -> vector<1x128x128xf32>
    %29 = vector.shape_cast %23 : vector<128x128xf32> to vector<1x128x128xf32>
    %30 = arith.mulf %28, %29 : vector<1x128x128xf32>
    %c127_i32_10 = arith.constant 127 : i32
    %31 = tpu.dynamic_rotate %2 by %c127_i32_10 dim 2 : vector<1x128x128xf32>, i32 -> vector<1x128x128xf32>
    %32 = vector.shape_cast %27 : vector<128x128xf32> to vector<1x128x128xf32>
    %33 = arith.mulf %31, %32 : vector<1x128x128xf32>
    %34 = arith.subf %33, %30 : vector<1x128x128xf32>
    %cst_11 = arith.constant 2.000000e+00 : f32
    %35 = vector.broadcast %cst_11 : f32 to vector<1x128x128xf32>
    %36 = arith.mulf %35, %2 : vector<1x128x128xf32>
    %37 = arith.addf %30, %36 : vector<1x128x128xf32>
    %38 = arith.addf %37, %33 : vector<1x128x128xf32>
    %c1_i32_12 = arith.constant 1 : i32
    %39 = tpu.dynamic_rotate %34 by %c1_i32_12 dim 1 : vector<1x128x128xf32>, i32 -> vector<1x128x128xf32>
    %40 = vector.shape_cast %15 : vector<128x128xf32> to vector<1x128x128xf32>
    %41 = arith.mulf %39, %40 : vector<1x128x128xf32>
    %c127_i32_13 = arith.constant 127 : i32
    %42 = tpu.dynamic_rotate %34 by %c127_i32_13 dim 1 : vector<1x128x128xf32>, i32 -> vector<1x128x128xf32>
    %43 = vector.shape_cast %19 : vector<128x128xf32> to vector<1x128x128xf32>
    %44 = arith.mulf %42, %43 : vector<1x128x128xf32>
    %c1_i32_14 = arith.constant 1 : i32
    %45 = tpu.dynamic_rotate %38 by %c1_i32_14 dim 1 : vector<1x128x128xf32>, i32 -> vector<1x128x128xf32>
    %46 = vector.shape_cast %15 : vector<128x128xf32> to vector<1x128x128xf32>
    %47 = arith.mulf %45, %46 : vector<1x128x128xf32>
    %c127_i32_15 = arith.constant 127 : i32
    %48 = tpu.dynamic_rotate %38 by %c127_i32_15 dim 1 : vector<1x128x128xf32>, i32 -> vector<1x128x128xf32>
    %49 = vector.shape_cast %19 : vector<128x128xf32> to vector<1x128x128xf32>
    %50 = arith.mulf %48, %49 : vector<1x128x128xf32>
    %cst_16 = arith.constant 2.000000e+00 : f32
    %51 = vector.broadcast %cst_16 : f32 to vector<1x128x128xf32>
    %52 = arith.mulf %51, %34 : vector<1x128x128xf32>
    %53 = arith.addf %41, %52 : vector<1x128x128xf32>
    %54 = arith.addf %53, %44 : vector<1x128x128xf32>
    %55 = arith.subf %47, %50 : vector<1x128x128xf32>
    %56 = math.absf %54 : vector<1x128x128xf32>
    %57 = math.absf %55 : vector<1x128x128xf32>
    %58 = arith.addf %56, %57 : vector<1x128x128xf32>
    %c1_i32_17 = arith.constant 1 : i32
    %59 = tpu.dynamic_rotate %1 by %c1_i32_17 dim 2 : vector<1x128x128xf32>, i32 -> vector<1x128x128xf32>
    %60 = vector.shape_cast %23 : vector<128x128xf32> to vector<1x128x128xf32>
    %61 = arith.mulf %59, %60 : vector<1x128x128xf32>
    %c127_i32_18 = arith.constant 127 : i32
    %62 = tpu.dynamic_rotate %1 by %c127_i32_18 dim 2 : vector<1x128x128xf32>, i32 -> vector<1x128x128xf32>
    %63 = vector.shape_cast %27 : vector<128x128xf32> to vector<1x128x128xf32>
    %64 = arith.mulf %62, %63 : vector<1x128x128xf32>
    %65 = arith.subf %64, %61 : vector<1x128x128xf32>
    %cst_19 = arith.constant 2.000000e+00 : f32
    %66 = vector.broadcast %cst_19 : f32 to vector<1x128x128xf32>
    %67 = arith.mulf %66, %1 : vector<1x128x128xf32>
    %68 = arith.addf %61, %67 : vector<1x128x128xf32>
    %69 = arith.addf %68, %64 : vector<1x128x128xf32>
    %c1_i32_20 = arith.constant 1 : i32
    %70 = tpu.dynamic_rotate %65 by %c1_i32_20 dim 1 : vector<1x128x128xf32>, i32 -> vector<1x128x128xf32>
    %71 = vector.shape_cast %15 : vector<128x128xf32> to vector<1x128x128xf32>
    %72 = arith.mulf %70, %71 : vector<1x128x128xf32>
    %c127_i32_21 = arith.constant 127 : i32
    %73 = tpu.dynamic_rotate %65 by %c127_i32_21 dim 1 : vector<1x128x128xf32>, i32 -> vector<1x128x128xf32>
    %74 = vector.shape_cast %19 : vector<128x128xf32> to vector<1x128x128xf32>
    %75 = arith.mulf %73, %74 : vector<1x128x128xf32>
    %c1_i32_22 = arith.constant 1 : i32
    %76 = tpu.dynamic_rotate %69 by %c1_i32_22 dim 1 : vector<1x128x128xf32>, i32 -> vector<1x128x128xf32>
    %77 = vector.shape_cast %15 : vector<128x128xf32> to vector<1x128x128xf32>
    %78 = arith.mulf %76, %77 : vector<1x128x128xf32>
    %c127_i32_23 = arith.constant 127 : i32
    %79 = tpu.dynamic_rotate %69 by %c127_i32_23 dim 1 : vector<1x128x128xf32>, i32 -> vector<1x128x128xf32>
    %80 = vector.shape_cast %19 : vector<128x128xf32> to vector<1x128x128xf32>
    %81 = arith.mulf %79, %80 : vector<1x128x128xf32>
    %cst_24 = arith.constant 2.000000e+00 : f32
    %82 = vector.broadcast %cst_24 : f32 to vector<1x128x128xf32>
    %83 = arith.mulf %82, %65 : vector<1x128x128xf32>
    %84 = arith.addf %72, %83 : vector<1x128x128xf32>
    %85 = arith.addf %84, %75 : vector<1x128x128xf32>
    %86 = arith.subf %78, %81 : vector<1x128x128xf32>
    %87 = math.absf %85 : vector<1x128x128xf32>
    %88 = math.absf %86 : vector<1x128x128xf32>
    %89 = arith.addf %87, %88 : vector<1x128x128xf32>
    %90 = arith.maximumf %58, %89 : vector<1x128x128xf32>
    %c1_i32_25 = arith.constant 1 : i32
    %91 = tpu.dynamic_rotate %0 by %c1_i32_25 dim 2 : vector<1x128x128xf32>, i32 -> vector<1x128x128xf32>
    %92 = vector.shape_cast %23 : vector<128x128xf32> to vector<1x128x128xf32>
    %93 = arith.mulf %91, %92 : vector<1x128x128xf32>
    %c127_i32_26 = arith.constant 127 : i32
    %94 = tpu.dynamic_rotate %0 by %c127_i32_26 dim 2 : vector<1x128x128xf32>, i32 -> vector<1x128x128xf32>
    %95 = vector.shape_cast %27 : vector<128x128xf32> to vector<1x128x128xf32>
    %96 = arith.mulf %94, %95 : vector<1x128x128xf32>
    %97 = arith.subf %96, %93 : vector<1x128x128xf32>
    %cst_27 = arith.constant 2.000000e+00 : f32
    %98 = vector.broadcast %cst_27 : f32 to vector<1x128x128xf32>
    %99 = arith.mulf %98, %0 : vector<1x128x128xf32>
    %100 = arith.addf %93, %99 : vector<1x128x128xf32>
    %101 = arith.addf %100, %96 : vector<1x128x128xf32>
    %c1_i32_28 = arith.constant 1 : i32
    %102 = tpu.dynamic_rotate %97 by %c1_i32_28 dim 1 : vector<1x128x128xf32>, i32 -> vector<1x128x128xf32>
    %103 = vector.shape_cast %15 : vector<128x128xf32> to vector<1x128x128xf32>
    %104 = arith.mulf %102, %103 : vector<1x128x128xf32>
    %c127_i32_29 = arith.constant 127 : i32
    %105 = tpu.dynamic_rotate %97 by %c127_i32_29 dim 1 : vector<1x128x128xf32>, i32 -> vector<1x128x128xf32>
    %106 = vector.shape_cast %19 : vector<128x128xf32> to vector<1x128x128xf32>
    %107 = arith.mulf %105, %106 : vector<1x128x128xf32>
    %c1_i32_30 = arith.constant 1 : i32
    %108 = tpu.dynamic_rotate %101 by %c1_i32_30 dim 1 : vector<1x128x128xf32>, i32 -> vector<1x128x128xf32>
    %109 = vector.shape_cast %15 : vector<128x128xf32> to vector<1x128x128xf32>
    %110 = arith.mulf %108, %109 : vector<1x128x128xf32>
    %c127_i32_31 = arith.constant 127 : i32
    %111 = tpu.dynamic_rotate %101 by %c127_i32_31 dim 1 : vector<1x128x128xf32>, i32 -> vector<1x128x128xf32>
    %112 = vector.shape_cast %19 : vector<128x128xf32> to vector<1x128x128xf32>
    %113 = arith.mulf %111, %112 : vector<1x128x128xf32>
    %cst_32 = arith.constant 2.000000e+00 : f32
    %114 = vector.broadcast %cst_32 : f32 to vector<1x128x128xf32>
    %115 = arith.mulf %114, %97 : vector<1x128x128xf32>
    %116 = arith.addf %104, %115 : vector<1x128x128xf32>
    %117 = arith.addf %116, %107 : vector<1x128x128xf32>
    %118 = arith.subf %110, %113 : vector<1x128x128xf32>
    %119 = math.absf %117 : vector<1x128x128xf32>
    %120 = math.absf %118 : vector<1x128x128xf32>
    %121 = arith.addf %119, %120 : vector<1x128x128xf32>
    %122 = arith.subf %90, %121 : vector<1x128x128xf32>
    %123 = math.absf %122 : vector<1x128x128xf32>
    %124 = vector.shape_cast %123 : vector<1x128x128xf32> to vector<1x1x128x128xf32>
    %cst_33 = arith.constant dense<0.000000e+00> : vector<1xf32>
    %125 = vector.multi_reduction <add>, %124, %cst_33 [1, 2, 3] : vector<1x1x128x128xf32> to vector<1xf32>
    %126 = vector.shape_cast %125 : vector<1xf32> to vector<1x1x1x1xf32>
    %127 = vector.extract %126[0, 0, 0, 0] : f32 from vector<1x1x1x1xf32>
    %128 = tpu.iota {dimensions = array<i32: 1>} : vector<1x8x128xi32>
    %129 = tpu.iota {dimensions = array<i32: 2>} : vector<1x8x128xi32>
    %c0_i32_34 = arith.constant 0 : i32
    %130 = vector.broadcast %c0_i32_34 : i32 to vector<1x8x128xi32>
    %131 = arith.cmpi eq, %129, %130 : vector<1x8x128xi32>
    %132 = vector.broadcast %9 : f32 to vector<1x8x128xf32>
    %133 = vector.broadcast %127 : f32 to vector<1x8x128xf32>
    %134 = arith.select %131, %132, %133 : vector<1x8x128xi1>, vector<1x8x128xf32>
    %c0_i32_35 = arith.constant 0 : i32
    %135 = vector.broadcast %c0_i32_35 : i32 to vector<1x8x128xi32>
    %136 = arith.cmpi eq, %128, %135 : vector<1x8x128xi32>
    %c2_i32 = arith.constant 2 : i32
    %137 = vector.broadcast %c2_i32 : i32 to vector<1x8x128xi32>
    %138 = arith.cmpi slt, %129, %137 : vector<1x8x128xi32>
    %139 = arith.andi %136, %138 : vector<1x8x128xi1>
    %cst_36 = arith.constant 0.000000e+00 : f32
    %140 = vector.broadcast %cst_36 : f32 to vector<1x8x128xf32>
    %141 = arith.select %139, %134, %140 : vector<1x8x128xi1>, vector<1x8x128xf32>
    %c0_37 = arith.constant 0 : index
    %c0_38 = arith.constant 0 : index
    %c0_39 = arith.constant 0 : index
    %142 = vector.load %arg4[%c0_37, %c0_38, %c0_39] : memref<1x8x128xf32, #tpu.memory_space<vmem>>, vector<1x8x128xf32>
    tpu.vector_store %arg4[%c0_37, %c0_38, %c0_39], %141 {strides = array<i32>} : memref<1x8x128xf32, #tpu.memory_space<vmem>>, vector<1x8x128xf32>,
    return
  }
  func.func @transform_0(%arg0: i32) -> (i32, i32, i32) {
    %c0_i32 = arith.constant 0 : i32
    %c0_i32_0 = arith.constant 0 : i32
    %c0_i32_1 = arith.constant 0 : i32
    return %arg0, %c0_i32, %c0_i32_0 : i32, i32, i32
  }
  func.func @transform_1(%arg0: i32) -> (i32, i32, i32) {
    %c0_i32 = arith.constant 0 : i32
    %c0_i32_0 = arith.constant 0 : i32
    %c0_i32_1 = arith.constant 0 : i32
    return %arg0, %c0_i32, %c0_i32_0 : i32, i32, i32
  }
  func.func @transform_2(%arg0: i32) -> (i32, i32, i32) {
    %c0_i32 = arith.constant 0 : i32
    %c0_i32_0 = arith.constant 0 : i32
    %c0_i32_1 = arith.constant 0 : i32
    return %arg0, %c0_i32, %c0_i32_0 : i32, i32, i32
  }
  func.func @transform_3(%arg0: i32) -> (i32, i32, i32) {
    %c0_i32 = arith.constant 0 : i32
    %c0_i32_0 = arith.constant 0 : i32
    %c0_i32_1 = arith.constant 0 : i32
    return %arg0, %c0_i32, %c0_i32_0 : i32, i32, i32
  }
}

</mosaic_0001>

<llo_original>
// kernel: tpu_custom_call.1
$region0: #{tpu_custom_call.1}
  #allocation0 [shape = 'u32[]', space=smem, size = 0x4, offset = 0x4, fixed_abs, tag = 'smem constant byte address 0x4 - core index']
  #allocation1 [shape = 'u32[144,128]{1,0:T(1,128)}', space=vmem, size = 0x12000, scoped, tag = 'internal scratch']
  %s0 = inlined_call_operand.hbm [shape: f32[2,128,128], index: 0, kind: input, shape index: {}]
  %s1 = inlined_call_operand.hbm [shape: f32[2,128,128], index: 1, kind: input, shape index: {}]
  %s2 = inlined_call_operand.hbm [shape: f32[2,128,128], index: 2, kind: input, shape index: {}]
  %s3 = inlined_call_operand.hbm [shape: f32[2,8,128], index: 3, kind: output, shape index: {}]
  %s4 = sld [smem:[#allocation0]]
  $region57: #{tpu_custom_call.1} parent=0
    _
  %s6 = ssub.s32 1, %s4
  %s7 = scalar_select 0, %s6, %s4
  $region1: #{tpu_custom_call.1} parent=0
    #allocation2 [shape = 'u8[131072]{0}', space=vmem, size = 0x20000, scoped, tag = 'input window, operand 0']
    #allocation3 [shape = 's32[2]{0}', space=sflag, size = 0x8, scoped, tag = 'scoped memory for tpu_custom_call.1']
    #allocation4 [shape = 's32[2]{0}', space=sflag, size = 0x8, scoped, tag = 'scoped memory for tpu_custom_call.1']
    #allocation5 [shape = 'u8[131072]{0}', space=vmem, size = 0x20000, scoped, tag = 'input window, operand 1']
    #allocation6 [shape = 's32[2]{0}', space=sflag, size = 0x8, scoped, tag = 'scoped memory for tpu_custom_call.1']
    #allocation7 [shape = 'u8[131072]{0}', space=vmem, size = 0x20000, scoped, tag = 'input window, operand 2']
    #allocation8 [shape = 'u8[8192]{0}', space=vmem, size = 0x2000, scoped, tag = 'output window, operand 0']
    %8 = vsyncpa [#allocation3], 0
    %s9 = scalar_lea.sflag [#allocation3], 1
    %10 = vsyncpa %s9, 0
    %11 = vsyncpa [#allocation6], 0
    %s12 = scalar_lea.sflag [#allocation6], 1
    %13 = vsyncpa %s12, 0
    %14 = vsyncpa [#allocation4], 0
    %s15 = scalar_lea.sflag [#allocation4], 1
    %16 = vsyncpa %s15, 0
    loop: start=0, step=1, limit=4
    $region2: #{tpu_custom_call.1} parent=1 // loop_pre_header
      _
    $region3: #{tpu_custom_call.1} parent=1 // loop_header
      %s18 = sphi 0, %s22
      %p19 = scmp.ge.s32.totalorder %s18, 4
      %s28 = sphi 0, %s30
      %s31 = sphi 0, %s28
      %s32 = sphi 0, %s31
      %s48 = sphi 0, %s32
      %s54 = sphi 0, %s56
      %s57 = sphi 0, %s54
      %s58 = sphi 0, %s57
      %s74 = sphi 0, %s58
      %s80 = sphi 0, %s82
      %s83 = sphi 0, %s80
      %s84 = sphi 0, %s83
      %s100 = sphi 0, %s84
      %s106 = sphi 0, %s108
      %s109 = sphi 0, %s106
      %s110 = sphi 0, %s109
      %s126 = sphi 0, %s110
    $region4: #{tpu_custom_call.1} parent=1 // loop_header_branch
      %21 = sbr.rel (%p19) target = $region8
    $region5: #{tpu_custom_call.1} parent=1 // loop_body
      %s23 = ssub.s32 %s18, 1
      %s24 = ssub.s32 %s18, 2
      %s25 = sadd.s32 %s18, 1
      %s26 = ssub.s32 %s18, %s25
      %p27 = scmp.eq.s32.totalorder %s26, 0
      %s29 = sadd.s32 %s28, 1
      %s30 = scalar_select %p27, %s28, %s29
      %p33 = pneg %p27
      %p34 = scmp.eq.s32.totalorder %s18, 1
      %p35 = por %p33, %p34
      %p36 = scmp.ne.s32.totalorder %s28, %s31
      %p37 = scmp.eq.s32.totalorder %s18, 0
      %p38 = por %p36, %p37
      %p39 = scmp.ne.s32.totalorder %s28, %s31
      %p40 = scmp.eq.s32.totalorder %s23, 1
      %p41 = por %p39, %p40
      %p42 = scmp.ne.s32.totalorder %s31, %s32
      %p43 = scmp.eq.s32.totalorder %s23, 0
      %p44 = por %p42, %p43
      %p45 = scmp.ne.s32.totalorder %s31, %s32
      %p46 = scmp.eq.s32.totalorder %s24, 1
      %p47 = por %p45, %p46
      %p49 = scmp.ne.s32.totalorder %s32, %s48
      %p50 = scmp.eq.s32.totalorder %s24, 0
      %p51 = por %p49, %p50
      %s52 = ssub.s32 %s18, %s25
      %p53 = scmp.eq.s32.totalorder %s52, 0
      %s55 = sadd.s32 %s54, 1
      %s56 = scalar_select %p53, %s54, %s55
      %p59 = pneg %p53
      %p60 = scmp.eq.s32.totalorder %s18, 1
      %p61 = por %p59, %p60
      %p62 = scmp.ne.s32.totalorder %s54, %s57
      %p63 = scmp.eq.s32.totalorder %s18, 0
      %p64 = por %p62, %p63
      %p65 = scmp.ne.s32.totalorder %s54, %s57
      %p66 = scmp.eq.s32.totalorder %s23, 1
      %p67 = por %p65, %p66
      %p68 = scmp.ne.s32.totalorder %s57, %s58
      %p69 = scmp.eq.s32.totalorder %s23, 0
      %p70 = por %p68, %p69
      %p71 = scmp.ne.s32.totalorder %s57, %s58
      %p72 = scmp.eq.s32.totalorder %s24, 1
      %p73 = por %p71, %p72
      %p75 = scmp.ne.s32.totalorder %s58, %s74
      %p76 = scmp.eq.s32.totalorder %s24, 0
      %p77 = por %p75, %p76
      %s78 = ssub.s32 %s18, %s25
      %p79 = scmp.eq.s32.totalorder %s78, 0
      %s81 = sadd.s32 %s80, 1
      %s82 = scalar_select %p79, %s80, %s81
      %p85 = pneg %p79
      %p86 = scmp.eq.s32.totalorder %s18, 1
      %p87 = por %p85, %p86
      %p88 = scmp.ne.s32.totalorder %s80, %s83
      %p89 = scmp.eq.s32.totalorder %s18, 0
      %p90 = por %p88, %p89
      %p91 = scmp.ne.s32.totalorder %s80, %s83
      %p92 = scmp.eq.s32.totalorder %s23, 1
      %p93 = por %p91, %p92
      %p94 = scmp.ne.s32.totalorder %s83, %s84
      %p95 = scmp.eq.s32.totalorder %s23, 0
      %p96 = por %p94, %p95
      %p97 = scmp.ne.s32.totalorder %s83, %s84
      %p98 = scmp.eq.s32.totalorder %s24, 1
      %p99 = por %p97, %p98
      %p101 = scmp.ne.s32.totalorder %s84, %s100
      %p102 = scmp.eq.s32.totalorder %s24, 0
      %p103 = por %p101, %p102
      %s104 = ssub.s32 %s18, %s25
      %p105 = scmp.eq.s32.totalorder %s104, 0
      %s107 = sadd.s32 %s106, 1
      %s108 = scalar_select %p105, %s106, %s107
      %p111 = pneg %p105
      %p112 = scmp.eq.s32.totalorder %s18, 1
      %p113 = por %p111, %p112
      %p114 = scmp.ne.s32.totalorder %s106, %s109
      %p115 = scmp.eq.s32.totalorder %s18, 0
      %p116 = por %p114, %p115
      %p117 = scmp.ne.s32.totalorder %s106, %s109
      %p118 = scmp.eq.s32.totalorder %s23, 1
      %p119 = por %p117, %p118
      %p120 = scmp.ne.s32.totalorder %s109, %s110
      %p121 = scmp.eq.s32.totalorder %s23, 0
      %p122 = por %p120, %p121
      %p123 = scmp.ne.s32.totalorder %s109, %s110
      %p124 = scmp.eq.s32.totalorder %s24, 1
      %p125 = por %p123, %p124
      %p127 = scmp.ne.s32.totalorder %s110, %s126
      %p128 = scmp.eq.s32.totalorder %s24, 0
      %p129 = por %p127, %p128
      %p130 = scmp.le.s32.totalorder 1, %s18
      %p131 = scmp.lt.s32.totalorder %s18, 3
      %p132 = pnand %p130, %p131
      %p133 = pneg %p132
      // Predicated region
      $region9: #{tpu_custom_call.1} parent=5 // pred_check
        _
      $region10: #{tpu_custom_call.1} parent=5 // pred_check_branch
        %135 = sbr.rel (%p132) target = $region12
      $region11: #{tpu_custom_call.1} parent=5 // pred_region
        %s136 = ssub.s32 %s18, 1
      $region12: #{tpu_custom_call.1} parent=5 // pred_fallthru
        _
      %p137 = scmp.lt.s32.totalorder %s18, 2
      // Predicated region
      $region13: #{tpu_custom_call.1} parent=5 // pred_check
        %p138 = pneg %p137
      $region14: #{tpu_custom_call.1} parent=5 // pred_check_branch
        %140 = sbr.rel (%p138) target = $region16
      $region15: #{tpu_custom_call.1} parent=5 // pred_region
        // Predicated region
        $region17: #{tpu_custom_call.1} parent=15 // pred_check
          %p141 = pneg %p38
        $region18: #{tpu_custom_call.1} parent=15 // pred_check_branch
          %143 = sbr.rel (%p141) target = $region20
        $region19: #{tpu_custom_call.1} parent=15 // pred_region
          %s144 = sand.u32 %s28, 1
          %s145 = scalar_lea.sflag [#allocation3], %s144
          %s146 = sand.u32 %s28, 1
          %s147 = smul.addr %s146, 128
          %s148 = scalar_lea.vmem [#allocation2], %s147
          %s150 = ssub.s32 2048, 2048
          %151 = vsyncadd %s145, %s150
          %s152 = smul.addr %s18, 16
          %s153 = smul.addr %s152, 128
          %s154 = scalar_lea.hbm %s0, %s153
          %s155 = sshll.u32 %s148, 4
          %s156 = int_to_ptr.vmem [resolvable:$true] %s155
          %161 = dma.hbm_to_vmem [thread:$0]  %s154, 2048, %s156, %s145, 128, 128, 8
        $region20: #{tpu_custom_call.1} parent=15 // pred_fallthru
          _
        // Predicated region
        $region21: #{tpu_custom_call.1} parent=15 // pred_check
          %p162 = pneg %p64
        $region22: #{tpu_custom_call.1} parent=15 // pred_check_branch
          %164 = sbr.rel (%p162) target = $region24
        $region23: #{tpu_custom_call.1} parent=15 // pred_region
          %s165 = sand.u32 %s18, 1
          %s166 = scalar_lea.sflag [#allocation6], %s165
          %s167 = sand.u32 %s54, 1
          %s168 = smul.addr %s167, 128
          %s169 = scalar_lea.vmem [#allocation5], %s168
          %s171 = ssub.s32 2048, 2048
          %172 = vsyncadd %s166, %s171
          %s173 = smul.addr %s18, 16
          %s174 = smul.addr %s173, 128
          %s175 = scalar_lea.hbm %s1, %s174
          %s176 = sshll.u32 %s169, 4
          %s177 = int_to_ptr.vmem [resolvable:$true] %s176
          %182 = dma.hbm_to_vmem [thread:$0]  %s175, 2048, %s177, %s166, 128, 128, 8
        $region24: #{tpu_custom_call.1} parent=15 // pred_fallthru
          _
        // Predicated region
        $region25: #{tpu_custom_call.1} parent=15 // pred_check
          %p183 = pneg %p90
        $region26: #{tpu_custom_call.1} parent=15 // pred_check_branch
          %185 = sbr.rel (%p183) target = $region28
        $region27: #{tpu_custom_call.1} parent=15 // pred_region
          %s186 = sand.u32 %s18, 1
          %s187 = scalar_lea.sflag [#allocation6], %s186
          %s188 = sand.u32 %s80, 1
          %s189 = smul.addr %s188, 128
          %s190 = scalar_lea.vmem [#allocation7], %s189
          %s192 = ssub.s32 2048, 2048
          %193 = vsyncadd %s187, %s192
          %s194 = smul.addr %s18, 16
          %s195 = smul.addr %s194, 128
          %s196 = scalar_lea.hbm %s2, %s195
          %s197 = sshll.u32 %s190, 4
          %s198 = int_to_ptr.vmem [resolvable:$true] %s197
          %203 = dma.hbm_to_vmem [thread:$0]  %s196, 2048, %s198, %s187, 128, 128, 8
        $region28: #{tpu_custom_call.1} parent=15 // pred_fallthru
          _
      $region16: #{tpu_custom_call.1} parent=5 // pred_fallthru
        _
      %p204 = scmp.le.s32.totalorder 1, %s18
      %p205 = scmp.lt.s32.totalorder %s18, 3
      %p206 = pnand %p204, %p205
      %p207 = pneg %p206
      // Predicated region
      $region29: #{tpu_custom_call.1} parent=5 // pred_check
        _
      $region30: #{tpu_custom_call.1} parent=5 // pred_check_branch
        %209 = sbr.rel (%p206) target = $region32
      $region31: #{tpu_custom_call.1} parent=5 // pred_region
        %s210 = ssub.s32 %s18, 1
        %s211 = sand.u32 %s31, 1
        %s212 = scalar_lea.sflag [#allocation3], %s211
        %s213 = sand.u32 %s31, 1
        %s214 = smul.addr %s213, 128
        %s215 = scalar_lea.vmem [#allocation2], %s214
        // Predicated region
        $region33: #{tpu_custom_call.1} parent=31 // pred_check
          %p216 = pneg %p44
        $region34: #{tpu_custom_call.1} parent=31 // pred_check_branch
          %218 = sbr.rel (%p216) target = $region36
        $region35: #{tpu_custom_call.1} parent=31 // pred_region
          %219 = dma.done %s212, 2048
        $region36: #{tpu_custom_call.1} parent=31 // pred_fallthru
          _
        %s220 = sand.u32 %s23, 1
        %s221 = scalar_lea.sflag [#allocation6], %s220
        %s222 = sand.u32 %s57, 1
        %s223 = smul.addr %s222, 128
        %s224 = scalar_lea.vmem [#allocation5], %s223
        // Predicated region
        $region37: #{tpu_custom_call.1} parent=31 // pred_check
          %p225 = pneg %p70
        $region38: #{tpu_custom_call.1} parent=31 // pred_check_branch
          %227 = sbr.rel (%p225) target = $region40
        $region39: #{tpu_custom_call.1} parent=31 // pred_region
          %228 = dma.done %s221, 2048
        $region40: #{tpu_custom_call.1} parent=31 // pred_fallthru
          _
        %s229 = sand.u32 %s23, 1
        %s230 = scalar_lea.sflag [#allocation6], %s229
        %s231 = sand.u32 %s83, 1
        %s232 = smul.addr %s231, 128
        %s233 = scalar_lea.vmem [#allocation7], %s232
        // Predicated region
        $region41: #{tpu_custom_call.1} parent=31 // pred_check
          %p234 = pneg %p96
        $region42: #{tpu_custom_call.1} parent=31 // pred_check_branch
          %236 = sbr.rel (%p234) target = $region44
        $region43: #{tpu_custom_call.1} parent=31 // pred_region
          %237 = dma.done %s230, 2048
        $region44: #{tpu_custom_call.1} parent=31 // pred_fallthru
          _
        %s238 = sand.u32 %s31, 1
        %s239 = scalar_lea.sflag [#allocation3], %s238
        %s240 = sand.u32 %s31, 1
        %s241 = smul.addr %s240, 128
        %s242 = scalar_lea.vmem [#allocation2], %s241
        %p243 = pneg %p44
        %p244 = pneg %p41
        %s245 = sand.u32 %s23, 1
        %s246 = scalar_lea.sflag [#allocation6], %s245
        %s247 = sand.u32 %s57, 1
        %s248 = smul.addr %s247, 128
        %s249 = scalar_lea.vmem [#allocation5], %s248
        %p250 = pneg %p70
        %p251 = pneg %p67
        %s252 = sand.u32 %s23, 1
        %s253 = scalar_lea.sflag [#allocation6], %s252
        %s254 = sand.u32 %s83, 1
        %s255 = smul.addr %s254, 128
        %s256 = scalar_lea.vmem [#allocation7], %s255
        %p257 = pneg %p96
        %p258 = pneg %p93
        %p259 = pneg %p122
        %p260 = pneg %p119
        %s261 = sand.u32 %s109, 1
        %s262 = scalar_lea.sflag [#allocation4], %s261
        %s263 = sand.u32 %s109, 1
        %s264 = smul.addr %s263, 8
        %s265 = scalar_lea.vmem [#allocation8], %s264
        %v266 = vld [vmem:[%s215] sm:$0xff]
        %v267 = vld [vmem:[%s215 + $0x8] sm:$0xff]
        %v268 = vld [vmem:[%s215 + $0x10] sm:$0xff]
        %v269 = vld [vmem:[%s215 + $0x18] sm:$0xff]
        %v270 = vld [vmem:[%s215 + $0x20] sm:$0xff]
        %v271 = vld [vmem:[%s215 + $0x28] sm:$0xff]
        %v272 = vld [vmem:[%s215 + $0x30] sm:$0xff]
        %v273 = vld [vmem:[%s215 + $0x38] sm:$0xff]
        %v274 = vld [vmem:[%s215 + $0x40] sm:$0xff]
        %v275 = vld [vmem:[%s215 + $0x48] sm:$0xff]
        %v276 = vld [vmem:[%s215 + $0x50] sm:$0xff]
        %v277 = vld [vmem:[%s215 + $0x58] sm:$0xff]
        %v278 = vld [vmem:[%s215 + $0x60] sm:$0xff]
        %v279 = vld [vmem:[%s215 + $0x68] sm:$0xff]
        %v280 = vld [vmem:[%s215 + $0x70] sm:$0xff]
        %v281 = vld [vmem:[%s215 + $0x78] sm:$0xff]
        %v282 = vld [vmem:[%s224] sm:$0xff]
        %v283 = vld [vmem:[%s224 + $0x8] sm:$0xff]
        %v284 = vld [vmem:[%s224 + $0x10] sm:$0xff]
        %v285 = vld [vmem:[%s224 + $0x18] sm:$0xff]
        %v286 = vld [vmem:[%s224 + $0x20] sm:$0xff]
        %v287 = vld [vmem:[%s224 + $0x28] sm:$0xff]
        %v288 = vld [vmem:[%s224 + $0x30] sm:$0xff]
        %v289 = vld [vmem:[%s224 + $0x38] sm:$0xff]
        %v290 = vld [vmem:[%s224 + $0x40] sm:$0xff]
        %v291 = vld [vmem:[%s224 + $0x48] sm:$0xff]
        %v292 = vld [vmem:[%s224 + $0x50] sm:$0xff]
        %v293 = vld [vmem:[%s224 + $0x58] sm:$0xff]
        %v294 = vld [vmem:[%s224 + $0x60] sm:$0xff]
        %v295 = vld [vmem:[%s224 + $0x68] sm:$0xff]
        %v296 = vld [vmem:[%s224 + $0x70] sm:$0xff]
        %v297 = vld [vmem:[%s224 + $0x78] sm:$0xff]
        %v298 = vld [vmem:[%s233] sm:$0xff]
        %v299 = vld [vmem:[%s233 + $0x8] sm:$0xff]
        %v300 = vld [vmem:[%s233 + $0x10] sm:$0xff]
        %v301 = vld [vmem:[%s233 + $0x18] sm:$0xff]
        %v302 = vld [vmem:[%s233 + $0x20] sm:$0xff]
        %v303 = vld [vmem:[%s233 + $0x28] sm:$0xff]
        %v304 = vld [vmem:[%s233 + $0x30] sm:$0xff]
        %v305 = vld [vmem:[%s233 + $0x38] sm:$0xff]
        %v306 = vld [vmem:[%s233 + $0x40] sm:$0xff]
        %v307 = vld [vmem:[%s233 + $0x48] sm:$0xff]
        %v308 = vld [vmem:[%s233 + $0x50] sm:$0xff]
        %v309 = vld [vmem:[%s233 + $0x58] sm:$0xff]
        %v310 = vld [vmem:[%s233 + $0x60] sm:$0xff]
        %v311 = vld [vmem:[%s233 + $0x68] sm:$0xff]
        %v312 = vld [vmem:[%s233 + $0x70] sm:$0xff]
        %v313 = vld [vmem:[%s233 + $0x78] sm:$0xff]
        %v314 = vmax.f32 %v298, %v282
        %v315 = vmax.f32 %v299, %v283
        %v316 = vmax.f32 %v300, %v284
        %v317 = vmax.f32 %v301, %v285
        %v318 = vmax.f32 %v302, %v286
        %v319 = vmax.f32 %v303, %v287
        %v320 = vmax.f32 %v304, %v288
        %v321 = vmax.f32 %v305, %v289
        %v322 = vmax.f32 %v306, %v290
        %v323 = vmax.f32 %v307, %v291
        %v324 = vmax.f32 %v308, %v292
        %v325 = vmax.f32 %v309, %v293
        %v326 = vmax.f32 %v310, %v294
        %v327 = vmax.f32 %v311, %v295
        %v328 = vmax.f32 %v312, %v296
        %v329 = vmax.f32 %v313, %v297
        %v330 = vsub.f32 %v314, %v266
        %v331 = vsub.f32 %v315, %v267
        %v332 = vsub.f32 %v316, %v268
        %v333 = vsub.f32 %v317, %v269
        %v334 = vsub.f32 %v318, %v270
        %v335 = vsub.f32 %v319, %v271
        %v336 = vsub.f32 %v320, %v272
        %v337 = vsub.f32 %v321, %v273
        %v338 = vsub.f32 %v322, %v274
        %v339 = vsub.f32 %v323, %v275
        %v340 = vsub.f32 %v324, %v276
        %v341 = vsub.f32 %v325, %v277
        %v342 = vsub.f32 %v326, %v278
        %v343 = vsub.f32 %v327, %v279
        %v344 = vsub.f32 %v328, %v280
        %v345 = vsub.f32 %v329, %v281
        %v346 = vand.u32 2147483647, %v330
        %v347 = vand.u32 2147483647, %v331
        %v348 = vand.u32 2147483647, %v332
        %v349 = vand.u32 2147483647, %v333
        %v350 = vand.u32 2147483647, %v334
        %v351 = vand.u32 2147483647, %v335
        %v352 = vand.u32 2147483647, %v336
        %v353 = vand.u32 2147483647, %v337
        %v354 = vand.u32 2147483647, %v338
        %v355 = vand.u32 2147483647, %v339
        %v356 = vand.u32 2147483647, %v340
        %v357 = vand.u32 2147483647, %v341
        %v358 = vand.u32 2147483647, %v342
        %v359 = vand.u32 2147483647, %v343
        %v360 = vand.u32 2147483647, %v344
        %v361 = vand.u32 2147483647, %v345
        %v362 = vadd.f32 %v346, %v347
        %v363 = vadd.f32 %v362, %v348
        %v364 = vadd.f32 %v363, %v349
        %v365 = vadd.f32 %v364, %v350
        %v366 = vadd.f32 %v365, %v351
        %v367 = vadd.f32 %v366, %v352
        %v368 = vadd.f32 %v367, %v353
        %v369 = vadd.f32 %v368, %v354
        %v370 = vadd.f32 %v369, %v355
        %v371 = vadd.f32 %v370, %v356
        %v372 = vadd.f32 %v371, %v357
        %v373 = vadd.f32 %v372, %v358
        %v374 = vadd.f32 %v373, %v359
        %v375 = vadd.f32 %v374, %v360
        %v376 = vadd.f32 %v375, %v361
        %377 = vadd.xlane.f32.xlu0 %v376
        %v378 = vpop.xlane.xlu0 %377
        %v379 = vrot.slane %v378, 4
        %v380 = vadd.f32 %v378, %v379
        %v381 = vrot.slane %v380, 2
        %v382 = vadd.f32 %v380, %v381
        %v383 = vrot.slane %v382, 1
        %v384 = vadd.f32 %v382, %v383
        %s385 = vtos %v384
        %v386 = vlaneseq
        %v387 = vshrl.u32 %v386, 7
        %v388 = vadd.s32 %v387, 8
        %v389 = vadd.s32 %v387, 16
        %v390 = vadd.s32 %v387, 24
        %v391 = vadd.s32 %v387, 32
        %v392 = vadd.s32 %v387, 40
        %v393 = vadd.s32 %v387, 48
        %v394 = vadd.s32 %v387, 56
        %v395 = vadd.s32 %v387, 64
        %v396 = vadd.s32 %v387, 72
        %v397 = vadd.s32 %v387, 80
        %v398 = vadd.s32 %v387, 88
        %v399 = vadd.s32 %v387, 96
        %v400 = vadd.s32 %v387, 104
        %v401 = vadd.s32 %v387, 112
        %v402 = vadd.s32 %v387, 120
        %v403 = vlaneseq
        %v404 = vand.u32 %v403, 127
        %vm405 = vcmp.gt.s32.totalorder %v387, 0
        %vm406 = vcmp.gt.s32.totalorder %v388, 0
        %vm407 = vcmp.gt.s32.totalorder %v389, 0
        %vm408 = vcmp.gt.s32.totalorder %v390, 0
        %vm409 = vcmp.gt.s32.totalorder %v391, 0
        %vm410 = vcmp.gt.s32.totalorder %v392, 0
        %vm411 = vcmp.gt.s32.totalorder %v393, 0
        %vm412 = vcmp.gt.s32.totalorder %v394, 0
        %vm413 = vcmp.gt.s32.totalorder %v395, 0
        %vm414 = vcmp.gt.s32.totalorder %v396, 0
        %vm415 = vcmp.gt.s32.totalorder %v397, 0
        %vm416 = vcmp.gt.s32.totalorder %v398, 0
        %vm417 = vcmp.gt.s32.totalorder %v399, 0
        %vm418 = vcmp.gt.s32.totalorder %v400, 0
        %vm419 = vcmp.gt.s32.totalorder %v401, 0
        %vm420 = vcmp.gt.s32.totalorder %v402, 0
        %v421 = vsel %vm405, 1, 0
        %v422 = vsel %vm406, 1, 0
        %v423 = vsel %vm407, 1, 0
        %v424 = vsel %vm408, 1, 0
        %v425 = vsel %vm409, 1, 0
        %v426 = vsel %vm410, 1, 0
        %v427 = vsel %vm411, 1, 0
        %v428 = vsel %vm412, 1, 0
        %v429 = vsel %vm413, 1, 0
        %v430 = vsel %vm414, 1, 0
        %v431 = vsel %vm415, 1, 0
        %v432 = vsel %vm416, 1, 0
        %v433 = vsel %vm417, 1, 0
        %v434 = vsel %vm418, 1, 0
        %v435 = vsel %vm419, 1, 0
        %v436 = vsel %vm420, 1, 0
        %v437 = vcvt.s32.f32 %v421
        %v438 = vcvt.s32.f32 %v422
        %v439 = vcvt.s32.f32 %v423
        %v440 = vcvt.s32.f32 %v424
        %v441 = vcvt.s32.f32 %v425
        %v442 = vcvt.s32.f32 %v426
        %v443 = vcvt.s32.f32 %v427
        %v444 = vcvt.s32.f32 %v428
        %v445 = vcvt.s32.f32 %v429
        %v446 = vcvt.s32.f32 %v430
        %v447 = vcvt.s32.f32 %v431
        %v448 = vcvt.s32.f32 %v432
        %v449 = vcvt.s32.f32 %v433
        %v450 = vcvt.s32.f32 %v434
        %v451 = vcvt.s32.f32 %v435
        %v452 = vcvt.s32.f32 %v436
        %vm453 = vcmp.lt.s32.totalorder %v387, 127
        %vm454 = vcmp.lt.s32.totalorder %v388, 127
        %vm455 = vcmp.lt.s32.totalorder %v389, 127
        %vm456 = vcmp.lt.s32.totalorder %v390, 127
        %vm457 = vcmp.lt.s32.totalorder %v391, 127
        %vm458 = vcmp.lt.s32.totalorder %v392, 127
        %vm459 = vcmp.lt.s32.totalorder %v393, 127
        %vm460 = vcmp.lt.s32.totalorder %v394, 127
        %vm461 = vcmp.lt.s32.totalorder %v395, 127
        %vm462 = vcmp.lt.s32.totalorder %v396, 127
        %vm463 = vcmp.lt.s32.totalorder %v397, 127
        %vm464 = vcmp.lt.s32.totalorder %v398, 127
        %vm465 = vcmp.lt.s32.totalorder %v399, 127
        %vm466 = vcmp.lt.s32.totalorder %v400, 127
        %vm467 = vcmp.lt.s32.totalorder %v401, 127
        %vm468 = vcmp.lt.s32.totalorder %v402, 127
        %v469 = vsel %vm453, 1, 0
        %v470 = vsel %vm454, 1, 0
        %v471 = vsel %vm455, 1, 0
        %v472 = vsel %vm456, 1, 0
        %v473 = vsel %vm457, 1, 0
        %v474 = vsel %vm458, 1, 0
        %v475 = vsel %vm459, 1, 0
        %v476 = vsel %vm460, 1, 0
        %v477 = vsel %vm461, 1, 0
        %v478 = vsel %vm462, 1, 0
        %v479 = vsel %vm463, 1, 0
        %v480 = vsel %vm464, 1, 0
        %v481 = vsel %vm465, 1, 0
        %v482 = vsel %vm466, 1, 0
        %v483 = vsel %vm467, 1, 0
        %v484 = vsel %vm468, 1, 0
        %v485 = vcvt.s32.f32 %v469
        %v486 = vcvt.s32.f32 %v470
        %v487 = vcvt.s32.f32 %v471
        %v488 = vcvt.s32.f32 %v472
        %v489 = vcvt.s32.f32 %v473
        %v490 = vcvt.s32.f32 %v474
        %v491 = vcvt.s32.f32 %v475
        %v492 = vcvt.s32.f32 %v476
        %v493 = vcvt.s32.f32 %v477
        %v494 = vcvt.s32.f32 %v478
        %v495 = vcvt.s32.f32 %v479
        %v496 = vcvt.s32.f32 %v480
        %v497 = vcvt.s32.f32 %v481
        %v498 = vcvt.s32.f32 %v482
        %v499 = vcvt.s32.f32 %v483
        %v500 = vcvt.s32.f32 %v484
        %vm501 = vcmp.gt.s32.totalorder %v404, 0
        %v502 = vsel %vm501, 1, 0
        %v503 = vcvt.s32.f32 %v502
        %vm504 = vcmp.lt.s32.totalorder %v404, 127
        %v505 = vsel %vm504, 1, 0
        %v506 = vcvt.s32.f32 %v505
        %507 = vrot.lane.b32.xlu0 %v298, 1
        %v508 = vpop.permute.xlu0 %507
        %509 = vrot.lane.b32.xlu0 %v299, 1
        %v510 = vpop.permute.xlu0 %509
        %511 = vrot.lane.b32.xlu0 %v300, 1
        %v512 = vpop.permute.xlu0 %511
        %513 = vrot.lane.b32.xlu0 %v301, 1
        %v514 = vpop.permute.xlu0 %513
        %515 = vrot.lane.b32.xlu0 %v302, 1
        %v516 = vpop.permute.xlu0 %515
        %517 = vrot.lane.b32.xlu0 %v303, 1
        %v518 = vpop.permute.xlu0 %517
        %519 = vrot.lane.b32.xlu0 %v304, 1
        %v520 = vpop.permute.xlu0 %519
        %521 = vrot.lane.b32.xlu0 %v305, 1
        %v522 = vpop.permute.xlu0 %521
        %523 = vrot.lane.b32.xlu0 %v306, 1
        %v524 = vpop.permute.xlu0 %523
        %525 = vrot.lane.b32.xlu0 %v307, 1
        %v526 = vpop.permute.xlu0 %525
        %527 = vrot.lane.b32.xlu0 %v308, 1
        %v528 = vpop.permute.xlu0 %527
        %529 = vrot.lane.b32.xlu0 %v309, 1
        %v530 = vpop.permute.xlu0 %529
        %531 = vrot.lane.b32.xlu0 %v310, 1
        %v532 = vpop.permute.xlu0 %531
        %533 = vrot.lane.b32.xlu0 %v311, 1
        %v534 = vpop.permute.xlu0 %533
        %535 = vrot.lane.b32.xlu0 %v312, 1
        %v536 = vpop.permute.xlu0 %535
        %537 = vrot.lane.b32.xlu0 %v313, 1
        %v538 = vpop.permute.xlu0 %537
        %v539 = vmul.f32 %v508, %v503
        %v540 = vmul.f32 %v510, %v503
        %v541 = vmul.f32 %v512, %v503
        %v542 = vmul.f32 %v514, %v503
        %v543 = vmul.f32 %v516, %v503
        %v544 = vmul.f32 %v518, %v503
        %v545 = vmul.f32 %v520, %v503
        %v546 = vmul.f32 %v522, %v503
        %v547 = vmul.f32 %v524, %v503
        %v548 = vmul.f32 %v526, %v503
        %v549 = vmul.f32 %v528, %v503
        %v550 = vmul.f32 %v530, %v503
        %v551 = vmul.f32 %v532, %v503
        %v552 = vmul.f32 %v534, %v503
        %v553 = vmul.f32 %v536, %v503
        %v554 = vmul.f32 %v538, %v503
        %555 = vrot.lane.b32.xlu0 %v298, 127
        %v556 = vpop.permute.xlu0 %555
        %557 = vrot.lane.b32.xlu0 %v299, 127
        %v558 = vpop.permute.xlu0 %557
        %559 = vrot.lane.b32.xlu0 %v300, 127
        %v560 = vpop.permute.xlu0 %559
        %561 = vrot.lane.b32.xlu0 %v301, 127
        %v562 = vpop.permute.xlu0 %561
        %563 = vrot.lane.b32.xlu0 %v302, 127
        %v564 = vpop.permute.xlu0 %563
        %565 = vrot.lane.b32.xlu0 %v303, 127
        %v566 = vpop.permute.xlu0 %565
        %567 = vrot.lane.b32.xlu0 %v304, 127
        %v568 = vpop.permute.xlu0 %567
        %569 = vrot.lane.b32.xlu0 %v305, 127
        %v570 = vpop.permute.xlu0 %569
        %571 = vrot.lane.b32.xlu0 %v306, 127
        %v572 = vpop.permute.xlu0 %571
        %573 = vrot.lane.b32.xlu0 %v307, 127
        %v574 = vpop.permute.xlu0 %573
        %575 = vrot.lane.b32.xlu0 %v308, 127
        %v576 = vpop.permute.xlu0 %575
        %577 = vrot.lane.b32.xlu0 %v309, 127
        %v578 = vpop.permute.xlu0 %577
        %579 = vrot.lane.b32.xlu0 %v310, 127
        %v580 = vpop.permute.xlu0 %579
        %581 = vrot.lane.b32.xlu0 %v311, 127
        %v582 = vpop.permute.xlu0 %581
        %583 = vrot.lane.b32.xlu0 %v312, 127
        %v584 = vpop.permute.xlu0 %583
        %585 = vrot.lane.b32.xlu0 %v313, 127
        %v586 = vpop.permute.xlu0 %585
        %v587 = vmul.f32 %v556, %v506
        %v588 = vmul.f32 %v558, %v506
        %v589 = vmul.f32 %v560, %v506
        %v590 = vmul.f32 %v562, %v506
        %v591 = vmul.f32 %v564, %v506
        %v592 = vmul.f32 %v566, %v506
        %v593 = vmul.f32 %v568, %v506
        %v594 = vmul.f32 %v570, %v506
        %v595 = vmul.f32 %v572, %v506
        %v596 = vmul.f32 %v574, %v506
        %v597 = vmul.f32 %v576, %v506
        %v598 = vmul.f32 %v578, %v506
        %v599 = vmul.f32 %v580, %v506
        %v600 = vmul.f32 %v582, %v506
        %v601 = vmul.f32 %v584, %v506
        %v602 = vmul.f32 %v586, %v506
        %v603 = vsub.f32 %v587, %v539
        %v604 = vsub.f32 %v588, %v540
        %v605 = vsub.f32 %v589, %v541
        %v606 = vsub.f32 %v590, %v542
        %v607 = vsub.f32 %v591, %v543
        %v608 = vsub.f32 %v592, %v544
        %v609 = vsub.f32 %v593, %v545
        %v610 = vsub.f32 %v594, %v546
        %v611 = vsub.f32 %v595, %v547
        %v612 = vsub.f32 %v596, %v548
        %v613 = vsub.f32 %v597, %v549
        %v614 = vsub.f32 %v598, %v550
        %v615 = vsub.f32 %v599, %v551
        %v616 = vsub.f32 %v600, %v552
        %v617 = vsub.f32 %v601, %v553
        %v618 = vsub.f32 %v602, %v554
        %v619 = vmul.f32 %v298, 2.0
        %v620 = vmul.f32 %v299, 2.0
        %v621 = vmul.f32 %v300, 2.0
        %v622 = vmul.f32 %v301, 2.0
        %v623 = vmul.f32 %v302, 2.0
        %v624 = vmul.f32 %v303, 2.0
        %v625 = vmul.f32 %v304, 2.0
        %v626 = vmul.f32 %v305, 2.0
        %v627 = vmul.f32 %v306, 2.0
        %v628 = vmul.f32 %v307, 2.0
        %v629 = vmul.f32 %v308, 2.0
        %v630 = vmul.f32 %v309, 2.0
        %v631 = vmul.f32 %v310, 2.0
        %v632 = vmul.f32 %v311, 2.0
        %v633 = vmul.f32 %v312, 2.0
        %v634 = vmul.f32 %v313, 2.0
        %v635 = vadd.f32 %v539, %v619
        %v636 = vadd.f32 %v540, %v620
        %v637 = vadd.f32 %v541, %v621
        %v638 = vadd.f32 %v542, %v622
        %v639 = vadd.f32 %v543, %v623
        %v640 = vadd.f32 %v544, %v624
        %v641 = vadd.f32 %v545, %v625
        %v642 = vadd.f32 %v546, %v626
        %v643 = vadd.f32 %v547, %v627
        %v644 = vadd.f32 %v548, %v628
        %v645 = vadd.f32 %v549, %v629
        %v646 = vadd.f32 %v550, %v630
        %v647 = vadd.f32 %v551, %v631
        %v648 = vadd.f32 %v552, %v632
        %v649 = vadd.f32 %v553, %v633
        %v650 = vadd.f32 %v554, %v634
        %v651 = vadd.f32 %v635, %v587
        %v652 = vadd.f32 %v636, %v588
        %v653 = vadd.f32 %v637, %v589
        %v654 = vadd.f32 %v638, %v590
        %v655 = vadd.f32 %v639, %v591
        %v656 = vadd.f32 %v640, %v592
        %v657 = vadd.f32 %v641, %v593
        %v658 = vadd.f32 %v642, %v594
        %v659 = vadd.f32 %v643, %v595
        %v660 = vadd.f32 %v644, %v596
        %v661 = vadd.f32 %v645, %v597
        %v662 = vadd.f32 %v646, %v598
        %v663 = vadd.f32 %v647, %v599
        %v664 = vadd.f32 %v648, %v600
        %v665 = vadd.f32 %v649, %v601
        %v666 = vadd.f32 %v650, %v602
        %v667 = vrot.slane %v603, 7
        %v668 = vrot.slane %v604, 7
        %v669 = vrot.slane %v605, 7
        %v670 = vrot.slane %v606, 7
        %v671 = vrot.slane %v607, 7
        %v672 = vrot.slane %v608, 7
        %v673 = vrot.slane %v609, 7
        %v674 = vrot.slane %v610, 7
        %v675 = vrot.slane %v611, 7
        %v676 = vrot.slane %v612, 7
        %v677 = vrot.slane %v613, 7
        %v678 = vrot.slane %v614, 7
        %v679 = vrot.slane %v615, 7
        %v680 = vrot.slane %v616, 7
        %v681 = vrot.slane %v617, 7
        %v682 = vrot.slane %v618, 7
        %vm683 = vcmp.lt.s32.totalorder %v387, 1
        %v684 = vsel %vm683, %v681, %v682
        %v685 = vsel %vm683, %v680, %v681
        %v686 = vsel %vm683, %v679, %v680
        %v687 = vsel %vm683, %v678, %v679
        %v688 = vsel %vm683, %v677, %v678
        %v689 = vsel %vm683, %v676, %v677
        %v690 = vsel %vm683, %v675, %v676
        %v691 = vsel %vm683, %v674, %v675
        %v692 = vsel %vm683, %v673, %v674
        %v693 = vsel %vm683, %v672, %v673
        %v694 = vsel %vm683, %v671, %v672
        %v695 = vsel %vm683, %v670, %v671
        %v696 = vsel %vm683, %v669, %v670
        %v697 = vsel %vm683, %v668, %v669
        %v698 = vsel %vm683, %v667, %v668
        %v699 = vsel %vm683, %v682, %v667
        %v700 = vmul.f32 %v699, %v437
        %v701 = vmul.f32 %v698, %v438
        %v702 = vmul.f32 %v697, %v439
        %v703 = vmul.f32 %v696, %v440
        %v704 = vmul.f32 %v695, %v441
        %v705 = vmul.f32 %v694, %v442
        %v706 = vmul.f32 %v693, %v443
        %v707 = vmul.f32 %v692, %v444
        %v708 = vmul.f32 %v691, %v445
        %v709 = vmul.f32 %v690, %v446
        %v710 = vmul.f32 %v689, %v447
        %v711 = vmul.f32 %v688, %v448
        %v712 = vmul.f32 %v687, %v449
        %v713 = vmul.f32 %v686, %v450
        %v714 = vmul.f32 %v685, %v451
        %v715 = vmul.f32 %v684, %v452
        %v716 = vrot.slane %v603, 1
        %v717 = vrot.slane %v604, 1
        %v718 = vrot.slane %v605, 1
        %v719 = vrot.slane %v606, 1
        %v720 = vrot.slane %v607, 1
        %v721 = vrot.slane %v608, 1
        %v722 = vrot.slane %v609, 1
        %v723 = vrot.slane %v610, 1
        %v724 = vrot.slane %v611, 1
        %v725 = vrot.slane %v612, 1
        %v726 = vrot.slane %v613, 1
        %v727 = vrot.slane %v614, 1
        %v728 = vrot.slane %v615, 1
        %v729 = vrot.slane %v616, 1
        %v730 = vrot.slane %v617, 1
        %v731 = vrot.slane %v618, 1
        %vm732 = vcmp.lt.s32.totalorder %v387, 7
        %v733 = vsel %vm732, %v730, %v731
        %v734 = vsel %vm732, %v729, %v730
        %v735 = vsel %vm732, %v728, %v729
        %v736 = vsel %vm732, %v727, %v728
        %v737 = vsel %vm732, %v726, %v727
        %v738 = vsel %vm732, %v725, %v726
        %v739 = vsel %vm732, %v724, %v725
        %v740 = vsel %vm732, %v723, %v724
        %v741 = vsel %vm732, %v722, %v723
        %v742 = vsel %vm732, %v721, %v722
        %v743 = vsel %vm732, %v720, %v721
        %v744 = vsel %vm732, %v719, %v720
        %v745 = vsel %vm732, %v718, %v719
        %v746 = vsel %vm732, %v717, %v718
        %v747 = vsel %vm732, %v716, %v717
        %v748 = vsel %vm732, %v731, %v716
        %v749 = vmul.f32 %v747, %v485
        %v750 = vmul.f32 %v746, %v486
        %v751 = vmul.f32 %v745, %v487
        %v752 = vmul.f32 %v744, %v488
        %v753 = vmul.f32 %v743, %v489
        %v754 = vmul.f32 %v742, %v490
        %v755 = vmul.f32 %v741, %v491
        %v756 = vmul.f32 %v740, %v492
        %v757 = vmul.f32 %v739, %v493
        %v758 = vmul.f32 %v738, %v494
        %v759 = vmul.f32 %v737, %v495
        %v760 = vmul.f32 %v736, %v496
        %v761 = vmul.f32 %v735, %v497
        %v762 = vmul.f32 %v734, %v498
        %v763 = vmul.f32 %v733, %v499
        %v764 = vmul.f32 %v748, %v500
        %v765 = vrot.slane %v651, 7
        %v766 = vrot.slane %v652, 7
        %v767 = vrot.slane %v653, 7
        %v768 = vrot.slane %v654, 7
        %v769 = vrot.slane %v655, 7
        %v770 = vrot.slane %v656, 7
        %v771 = vrot.slane %v657, 7
        %v772 = vrot.slane %v658, 7
        %v773 = vrot.slane %v659, 7
        %v774 = vrot.slane %v660, 7
        %v775 = vrot.slane %v661, 7
        %v776 = vrot.slane %v662, 7
        %v777 = vrot.slane %v663, 7
        %v778 = vrot.slane %v664, 7
        %v779 = vrot.slane %v665, 7
        %v780 = vrot.slane %v666, 7
        %v781 = vsel %vm683, %v779, %v780
        %v782 = vsel %vm683, %v778, %v779
        %v783 = vsel %vm683, %v777, %v778
        %v784 = vsel %vm683, %v776, %v777
        %v785 = vsel %vm683, %v775, %v776
        %v786 = vsel %vm683, %v774, %v775
        %v787 = vsel %vm683, %v773, %v774
        %v788 = vsel %vm683, %v772, %v773
        %v789 = vsel %vm683, %v771, %v772
        %v790 = vsel %vm683, %v770, %v771
        %v791 = vsel %vm683, %v769, %v770
        %v792 = vsel %vm683, %v768, %v769
        %v793 = vsel %vm683, %v767, %v768
        %v794 = vsel %vm683, %v766, %v767
        %v795 = vsel %vm683, %v765, %v766
        %v796 = vsel %vm683, %v780, %v765
        %v797 = vmul.f32 %v796, %v437
        %v798 = vmul.f32 %v795, %v438
        %v799 = vmul.f32 %v794, %v439
        %v800 = vmul.f32 %v793, %v440
        %v801 = vmul.f32 %v792, %v441
        %v802 = vmul.f32 %v791, %v442
        %v803 = vmul.f32 %v790, %v443
        %v804 = vmul.f32 %v789, %v444
        %v805 = vmul.f32 %v788, %v445
        %v806 = vmul.f32 %v787, %v446
        %v807 = vmul.f32 %v786, %v447
        %v808 = vmul.f32 %v785, %v448
        %v809 = vmul.f32 %v784, %v449
        %v810 = vmul.f32 %v783, %v450
        %v811 = vmul.f32 %v782, %v451
        %v812 = vmul.f32 %v781, %v452
        %v813 = vrot.slane %v651, 1
        %v814 = vrot.slane %v652, 1
        %v815 = vrot.slane %v653, 1
        %v816 = vrot.slane %v654, 1
        %v817 = vrot.slane %v655, 1
        %v818 = vrot.slane %v656, 1
        %v819 = vrot.slane %v657, 1
        %v820 = vrot.slane %v658, 1
        %v821 = vrot.slane %v659, 1
        %v822 = vrot.slane %v660, 1
        %v823 = vrot.slane %v661, 1
        %v824 = vrot.slane %v662, 1
        %v825 = vrot.slane %v663, 1
        %v826 = vrot.slane %v664, 1
        %v827 = vrot.slane %v665, 1
        %v828 = vrot.slane %v666, 1
        %v829 = vsel %vm732, %v827, %v828
        %v830 = vsel %vm732, %v826, %v827
        %v831 = vsel %vm732, %v825, %v826
        %v832 = vsel %vm732, %v824, %v825
        %v833 = vsel %vm732, %v823, %v824
        %v834 = vsel %vm732, %v822, %v823
        %v835 = vsel %vm732, %v821, %v822
        %v836 = vsel %vm732, %v820, %v821
        %v837 = vsel %vm732, %v819, %v820
        %v838 = vsel %vm732, %v818, %v819
        %v839 = vsel %vm732, %v817, %v818
        %v840 = vsel %vm732, %v816, %v817
        %v841 = vsel %vm732, %v815, %v816
        %v842 = vsel %vm732, %v814, %v815
        %v843 = vsel %vm732, %v813, %v814
        %v844 = vsel %vm732, %v828, %v813
        %v845 = vmul.f32 %v843, %v485
        %v846 = vmul.f32 %v842, %v486
        %v847 = vmul.f32 %v841, %v487
        %v848 = vmul.f32 %v840, %v488
        %v849 = vmul.f32 %v839, %v489
        %v850 = vmul.f32 %v838, %v490
        %v851 = vmul.f32 %v837, %v491
        %v852 = vmul.f32 %v836, %v492
        %v853 = vmul.f32 %v835, %v493
        %v854 = vmul.f32 %v834, %v494
        %v855 = vmul.f32 %v833, %v495
        %v856 = vmul.f32 %v832, %v496
        %v857 = vmul.f32 %v831, %v497
        %v858 = vmul.f32 %v830, %v498
        %v859 = vmul.f32 %v829, %v499
        %v860 = vmul.f32 %v844, %v500
        %v861 = vmul.f32 %v603, 2.0
        %v862 = vmul.f32 %v604, 2.0
        %v863 = vmul.f32 %v605, 2.0
        %v864 = vmul.f32 %v606, 2.0
        %v865 = vmul.f32 %v607, 2.0
        %v866 = vmul.f32 %v608, 2.0
        %v867 = vmul.f32 %v609, 2.0
        %v868 = vmul.f32 %v610, 2.0
        %v869 = vmul.f32 %v611, 2.0
        %v870 = vmul.f32 %v612, 2.0
        %v871 = vmul.f32 %v613, 2.0
        %v872 = vmul.f32 %v614, 2.0
        %v873 = vmul.f32 %v615, 2.0
        %v874 = vmul.f32 %v616, 2.0
        %v875 = vmul.f32 %v617, 2.0
        %v876 = vmul.f32 %v618, 2.0
        %v877 = vadd.f32 %v700, %v861
        %v878 = vadd.f32 %v701, %v862
        %v879 = vadd.f32 %v702, %v863
        %v880 = vadd.f32 %v703, %v864
        %v881 = vadd.f32 %v704, %v865
        %v882 = vadd.f32 %v705, %v866
        %v883 = vadd.f32 %v706, %v867
        %v884 = vadd.f32 %v707, %v868
        %v885 = vadd.f32 %v708, %v869
        %v886 = vadd.f32 %v709, %v870
        %v887 = vadd.f32 %v710, %v871
        %v888 = vadd.f32 %v711, %v872
        %v889 = vadd.f32 %v712, %v873
        %v890 = vadd.f32 %v713, %v874
        %v891 = vadd.f32 %v714, %v875
        %v892 = vadd.f32 %v715, %v876
        %v893 = vadd.f32 %v877, %v749
        %v894 = vadd.f32 %v878, %v750
        %v895 = vadd.f32 %v879, %v751
        %v896 = vadd.f32 %v880, %v752
        %v897 = vadd.f32 %v881, %v753
        %v898 = vadd.f32 %v882, %v754
        %v899 = vadd.f32 %v883, %v755
        %v900 = vadd.f32 %v884, %v756
        %v901 = vadd.f32 %v885, %v757
        %v902 = vadd.f32 %v886, %v758
        %v903 = vadd.f32 %v887, %v759
        %v904 = vadd.f32 %v888, %v760
        %v905 = vadd.f32 %v889, %v761
        %v906 = vadd.f32 %v890, %v762
        %v907 = vadd.f32 %v891, %v763
        %v908 = vadd.f32 %v892, %v764
        %v909 = vsub.f32 %v797, %v845
        %v910 = vsub.f32 %v798, %v846
        %v911 = vsub.f32 %v799, %v847
        %v912 = vsub.f32 %v800, %v848
        %v913 = vsub.f32 %v801, %v849
        %v914 = vsub.f32 %v802, %v850
        %v915 = vsub.f32 %v803, %v851
        %v916 = vsub.f32 %v804, %v852
        %v917 = vsub.f32 %v805, %v853
        %v918 = vsub.f32 %v806, %v854
        %v919 = vsub.f32 %v807, %v855
        %v920 = vsub.f32 %v808, %v856
        %v921 = vsub.f32 %v809, %v857
        %v922 = vsub.f32 %v810, %v858
        %v923 = vsub.f32 %v811, %v859
        %v924 = vsub.f32 %v812, %v860
        %v925 = vand.u32 2147483647, %v893
        %v926 = vand.u32 2147483647, %v894
        %v927 = vand.u32 2147483647, %v895
        %v928 = vand.u32 2147483647, %v896
        %v929 = vand.u32 2147483647, %v897
        %v930 = vand.u32 2147483647, %v898
        %v931 = vand.u32 2147483647, %v899
        %v932 = vand.u32 2147483647, %v900
        %v933 = vand.u32 2147483647, %v901
        %v934 = vand.u32 2147483647, %v902
        %v935 = vand.u32 2147483647, %v903
        %v936 = vand.u32 2147483647, %v904
        %v937 = vand.u32 2147483647, %v905
        %v938 = vand.u32 2147483647, %v906
        %v939 = vand.u32 2147483647, %v907
        %v940 = vand.u32 2147483647, %v908
        %v941 = vand.u32 2147483647, %v909
        %v942 = vand.u32 2147483647, %v910
        %v943 = vand.u32 2147483647, %v911
        %v944 = vand.u32 2147483647, %v912
        %v945 = vand.u32 2147483647, %v913
        %v946 = vand.u32 2147483647, %v914
        %v947 = vand.u32 2147483647, %v915
        %v948 = vand.u32 2147483647, %v916
        %v949 = vand.u32 2147483647, %v917
        %v950 = vand.u32 2147483647, %v918
        %v951 = vand.u32 2147483647, %v919
        %v952 = vand.u32 2147483647, %v920
        %v953 = vand.u32 2147483647, %v921
        %v954 = vand.u32 2147483647, %v922
        %v955 = vand.u32 2147483647, %v923
        %v956 = vand.u32 2147483647, %v924
        %v957 = vadd.f32 %v925, %v941
        %v958 = vadd.f32 %v926, %v942
        %v959 = vadd.f32 %v927, %v943
        %v960 = vadd.f32 %v928, %v944
        %v961 = vadd.f32 %v929, %v945
        %v962 = vadd.f32 %v930, %v946
        %v963 = vadd.f32 %v931, %v947
        %v964 = vadd.f32 %v932, %v948
        %v965 = vadd.f32 %v933, %v949
        %v966 = vadd.f32 %v934, %v950
        %v967 = vadd.f32 %v935, %v951
        %v968 = vadd.f32 %v936, %v952
        %v969 = vadd.f32 %v937, %v953
        %v970 = vadd.f32 %v938, %v954
        %v971 = vadd.f32 %v939, %v955
        %v972 = vadd.f32 %v940, %v956
        %973 = vrot.lane.b32.xlu0 %v282, 1
        %v974 = vpop.permute.xlu0 %973
        %975 = vrot.lane.b32.xlu0 %v283, 1
        %v976 = vpop.permute.xlu0 %975
        %977 = vrot.lane.b32.xlu0 %v284, 1
        %v978 = vpop.permute.xlu0 %977
        %979 = vrot.lane.b32.xlu0 %v285, 1
        %v980 = vpop.permute.xlu0 %979
        %981 = vrot.lane.b32.xlu0 %v286, 1
        %v982 = vpop.permute.xlu0 %981
        %983 = vrot.lane.b32.xlu0 %v287, 1
        %v984 = vpop.permute.xlu0 %983
        %985 = vrot.lane.b32.xlu0 %v288, 1
        %v986 = vpop.permute.xlu0 %985
        %987 = vrot.lane.b32.xlu0 %v289, 1
        %v988 = vpop.permute.xlu0 %987
        %989 = vrot.lane.b32.xlu0 %v290, 1
        %v990 = vpop.permute.xlu0 %989
        %991 = vrot.lane.b32.xlu0 %v291, 1
        %v992 = vpop.permute.xlu0 %991
        %993 = vrot.lane.b32.xlu0 %v292, 1
        %v994 = vpop.permute.xlu0 %993
        %995 = vrot.lane.b32.xlu0 %v293, 1
        %v996 = vpop.permute.xlu0 %995
        %997 = vrot.lane.b32.xlu0 %v294, 1
        %v998 = vpop.permute.xlu0 %997
        %999 = vrot.lane.b32.xlu0 %v295, 1
        %v1000 = vpop.permute.xlu0 %999
        %1001 = vrot.lane.b32.xlu0 %v296, 1
        %v1002 = vpop.permute.xlu0 %1001
        %1003 = vrot.lane.b32.xlu0 %v297, 1
        %v1004 = vpop.permute.xlu0 %1003
        %v1005 = vmul.f32 %v974, %v503
        %v1006 = vmul.f32 %v976, %v503
        %v1007 = vmul.f32 %v978, %v503
        %v1008 = vmul.f32 %v980, %v503
        %v1009 = vmul.f32 %v982, %v503
        %v1010 = vmul.f32 %v984, %v503
        %v1011 = vmul.f32 %v986, %v503
        %v1012 = vmul.f32 %v988, %v503
        %v1013 = vmul.f32 %v990, %v503
        %v1014 = vmul.f32 %v992, %v503
        %v1015 = vmul.f32 %v994, %v503
        %v1016 = vmul.f32 %v996, %v503
        %v1017 = vmul.f32 %v998, %v503
        %v1018 = vmul.f32 %v1000, %v503
        %v1019 = vmul.f32 %v1002, %v503
        %v1020 = vmul.f32 %v1004, %v503
        %1021 = vrot.lane.b32.xlu0 %v282, 127
        %v1022 = vpop.permute.xlu0 %1021
        %1023 = vrot.lane.b32.xlu0 %v283, 127
        %v1024 = vpop.permute.xlu0 %1023
        %1025 = vrot.lane.b32.xlu0 %v284, 127
        %v1026 = vpop.permute.xlu0 %1025
        %1027 = vrot.lane.b32.xlu0 %v285, 127
        %v1028 = vpop.permute.xlu0 %1027
        %1029 = vrot.lane.b32.xlu0 %v286, 127
        %v1030 = vpop.permute.xlu0 %1029
        %1031 = vrot.lane.b32.xlu0 %v287, 127
        %v1032 = vpop.permute.xlu0 %1031
        %1033 = vrot.lane.b32.xlu0 %v288, 127
        %v1034 = vpop.permute.xlu0 %1033
        %1035 = vrot.lane.b32.xlu0 %v289, 127
        %v1036 = vpop.permute.xlu0 %1035
        %1037 = vrot.lane.b32.xlu0 %v290, 127
        %v1038 = vpop.permute.xlu0 %1037
        %1039 = vrot.lane.b32.xlu0 %v291, 127
        %v1040 = vpop.permute.xlu0 %1039
        %1041 = vrot.lane.b32.xlu0 %v292, 127
        %v1042 = vpop.permute.xlu0 %1041
        %1043 = vrot.lane.b32.xlu0 %v293, 127
        %v1044 = vpop.permute.xlu0 %1043
        %1045 = vrot.lane.b32.xlu0 %v294, 127
        %v1046 = vpop.permute.xlu0 %1045
        %1047 = vrot.lane.b32.xlu0 %v295, 127
        %v1048 = vpop.permute.xlu0 %1047
        %1049 = vrot.lane.b32.xlu0 %v296, 127
        %v1050 = vpop.permute.xlu0 %1049
        %1051 = vrot.lane.b32.xlu0 %v297, 127
        %v1052 = vpop.permute.xlu0 %1051
        %v1053 = vmul.f32 %v1022, %v506
        %v1054 = vmul.f32 %v1024, %v506
        %v1055 = vmul.f32 %v1026, %v506
        %v1056 = vmul.f32 %v1028, %v506
        %v1057 = vmul.f32 %v1030, %v506
        %v1058 = vmul.f32 %v1032, %v506
        %v1059 = vmul.f32 %v1034, %v506
        %v1060 = vmul.f32 %v1036, %v506
        %v1061 = vmul.f32 %v1038, %v506
        %v1062 = vmul.f32 %v1040, %v506
        %v1063 = vmul.f32 %v1042, %v506
        %v1064 = vmul.f32 %v1044, %v506
        %v1065 = vmul.f32 %v1046, %v506
        %v1066 = vmul.f32 %v1048, %v506
        %v1067 = vmul.f32 %v1050, %v506
        %v1068 = vmul.f32 %v1052, %v506
        %v1069 = vsub.f32 %v1053, %v1005
        %v1070 = vsub.f32 %v1054, %v1006
        %v1071 = vsub.f32 %v1055, %v1007
        %v1072 = vsub.f32 %v1056, %v1008
        %v1073 = vsub.f32 %v1057, %v1009
        %v1074 = vsub.f32 %v1058, %v1010
        %v1075 = vsub.f32 %v1059, %v1011
        %v1076 = vsub.f32 %v1060, %v1012
        %v1077 = vsub.f32 %v1061, %v1013
        %v1078 = vsub.f32 %v1062, %v1014
        %v1079 = vsub.f32 %v1063, %v1015
        %v1080 = vsub.f32 %v1064, %v1016
        %v1081 = vsub.f32 %v1065, %v1017
        %v1082 = vsub.f32 %v1066, %v1018
        %v1083 = vsub.f32 %v1067, %v1019
        %v1084 = vsub.f32 %v1068, %v1020
        %v1085 = vmul.f32 %v282, 2.0
        %v1086 = vmul.f32 %v283, 2.0
        %v1087 = vmul.f32 %v284, 2.0
        %v1088 = vmul.f32 %v285, 2.0
        %v1089 = vmul.f32 %v286, 2.0
        %v1090 = vmul.f32 %v287, 2.0
        %v1091 = vmul.f32 %v288, 2.0
        %v1092 = vmul.f32 %v289, 2.0
        %v1093 = vmul.f32 %v290, 2.0
        %v1094 = vmul.f32 %v291, 2.0
        %v1095 = vmul.f32 %v292, 2.0
        %v1096 = vmul.f32 %v293, 2.0
        %v1097 = vmul.f32 %v294, 2.0
        %v1098 = vmul.f32 %v295, 2.0
        %v1099 = vmul.f32 %v296, 2.0
        %v1100 = vmul.f32 %v297, 2.0
        %v1101 = vadd.f32 %v1005, %v1085
        %v1102 = vadd.f32 %v1006, %v1086
        %v1103 = vadd.f32 %v1007, %v1087
        %v1104 = vadd.f32 %v1008, %v1088
        %v1105 = vadd.f32 %v1009, %v1089
        %v1106 = vadd.f32 %v1010, %v1090
        %v1107 = vadd.f32 %v1011, %v1091
        %v1108 = vadd.f32 %v1012, %v1092
        %v1109 = vadd.f32 %v1013, %v1093
        %v1110 = vadd.f32 %v1014, %v1094
        %v1111 = vadd.f32 %v1015, %v1095
        %v1112 = vadd.f32 %v1016, %v1096
        %v1113 = vadd.f32 %v1017, %v1097
        %v1114 = vadd.f32 %v1018, %v1098
        %v1115 = vadd.f32 %v1019, %v1099
        %v1116 = vadd.f32 %v1020, %v1100
        %v1117 = vadd.f32 %v1101, %v1053
        %v1118 = vadd.f32 %v1102, %v1054
        %v1119 = vadd.f32 %v1103, %v1055
        %v1120 = vadd.f32 %v1104, %v1056
        %v1121 = vadd.f32 %v1105, %v1057
        %v1122 = vadd.f32 %v1106, %v1058
        %v1123 = vadd.f32 %v1107, %v1059
        %v1124 = vadd.f32 %v1108, %v1060
        %v1125 = vadd.f32 %v1109, %v1061
        %v1126 = vadd.f32 %v1110, %v1062
        %v1127 = vadd.f32 %v1111, %v1063
        %v1128 = vadd.f32 %v1112, %v1064
        %v1129 = vadd.f32 %v1113, %v1065
        %v1130 = vadd.f32 %v1114, %v1066
        %v1131 = vadd.f32 %v1115, %v1067
        %v1132 = vadd.f32 %v1116, %v1068
        %v1133 = vrot.slane %v1069, 7
        %v1134 = vrot.slane %v1070, 7
        %v1135 = vrot.slane %v1071, 7
        %v1136 = vrot.slane %v1072, 7
        %v1137 = vrot.slane %v1073, 7
        %v1138 = vrot.slane %v1074, 7
        %v1139 = vrot.slane %v1075, 7
        %v1140 = vrot.slane %v1076, 7
        %v1141 = vrot.slane %v1077, 7
        %v1142 = vrot.slane %v1078, 7
        %v1143 = vrot.slane %v1079, 7
        %v1144 = vrot.slane %v1080, 7
        %v1145 = vrot.slane %v1081, 7
        %v1146 = vrot.slane %v1082, 7
        %v1147 = vrot.slane %v1083, 7
        %v1148 = vrot.slane %v1084, 7
        %v1149 = vsel %vm683, %v1147, %v1148
        %v1150 = vsel %vm683, %v1146, %v1147
        %v1151 = vsel %vm683, %v1145, %v1146
        %v1152 = vsel %vm683, %v1144, %v1145
        %v1153 = vsel %vm683, %v1143, %v1144
        %v1154 = vsel %vm683, %v1142, %v1143
        %v1155 = vsel %vm683, %v1141, %v1142
        %v1156 = vsel %vm683, %v1140, %v1141
        %v1157 = vsel %vm683, %v1139, %v1140
        %v1158 = vsel %vm683, %v1138, %v1139
        %v1159 = vsel %vm683, %v1137, %v1138
        %v1160 = vsel %vm683, %v1136, %v1137
        %v1161 = vsel %vm683, %v1135, %v1136
        %v1162 = vsel %vm683, %v1134, %v1135
        %v1163 = vsel %vm683, %v1133, %v1134
        %v1164 = vsel %vm683, %v1148, %v1133
        %v1165 = vmul.f32 %v1164, %v437
        %v1166 = vmul.f32 %v1163, %v438
        %v1167 = vmul.f32 %v1162, %v439
        %v1168 = vmul.f32 %v1161, %v440
        %v1169 = vmul.f32 %v1160, %v441
        %v1170 = vmul.f32 %v1159, %v442
        %v1171 = vmul.f32 %v1158, %v443
        %v1172 = vmul.f32 %v1157, %v444
        %v1173 = vmul.f32 %v1156, %v445
        %v1174 = vmul.f32 %v1155, %v446
        %v1175 = vmul.f32 %v1154, %v447
        %v1176 = vmul.f32 %v1153, %v448
        %v1177 = vmul.f32 %v1152, %v449
        %v1178 = vmul.f32 %v1151, %v450
        %v1179 = vmul.f32 %v1150, %v451
        %v1180 = vmul.f32 %v1149, %v452
        %v1181 = vrot.slane %v1069, 1
        %v1182 = vrot.slane %v1070, 1
        %v1183 = vrot.slane %v1071, 1
        %v1184 = vrot.slane %v1072, 1
        %v1185 = vrot.slane %v1073, 1
        %v1186 = vrot.slane %v1074, 1
        %v1187 = vrot.slane %v1075, 1
        %v1188 = vrot.slane %v1076, 1
        %v1189 = vrot.slane %v1077, 1
        %v1190 = vrot.slane %v1078, 1
        %v1191 = vrot.slane %v1079, 1
        %v1192 = vrot.slane %v1080, 1
        %v1193 = vrot.slane %v1081, 1
        %v1194 = vrot.slane %v1082, 1
        %v1195 = vrot.slane %v1083, 1
        %v1196 = vrot.slane %v1084, 1
        %v1197 = vsel %vm732, %v1195, %v1196
        %v1198 = vsel %vm732, %v1194, %v1195
        %v1199 = vsel %vm732, %v1193, %v1194
        %v1200 = vsel %vm732, %v1192, %v1193
        %v1201 = vsel %vm732, %v1191, %v1192
        %v1202 = vsel %vm732, %v1190, %v1191
        %v1203 = vsel %vm732, %v1189, %v1190
        %v1204 = vsel %vm732, %v1188, %v1189
        %v1205 = vsel %vm732, %v1187, %v1188
        %v1206 = vsel %vm732, %v1186, %v1187
        %v1207 = vsel %vm732, %v1185, %v1186
        %v1208 = vsel %vm732, %v1184, %v1185
        %v1209 = vsel %vm732, %v1183, %v1184
        %v1210 = vsel %vm732, %v1182, %v1183
        %v1211 = vsel %vm732, %v1181, %v1182
        %v1212 = vsel %vm732, %v1196, %v1181
        %v1213 = vmul.f32 %v1211, %v485
        %v1214 = vmul.f32 %v1210, %v486
        %v1215 = vmul.f32 %v1209, %v487
        %v1216 = vmul.f32 %v1208, %v488
        %v1217 = vmul.f32 %v1207, %v489
        %v1218 = vmul.f32 %v1206, %v490
        %v1219 = vmul.f32 %v1205, %v491
        %v1220 = vmul.f32 %v1204, %v492
        %v1221 = vmul.f32 %v1203, %v493
        %v1222 = vmul.f32 %v1202, %v494
        %v1223 = vmul.f32 %v1201, %v495
        %v1224 = vmul.f32 %v1200, %v496
        %v1225 = vmul.f32 %v1199, %v497
        %v1226 = vmul.f32 %v1198, %v498
        %v1227 = vmul.f32 %v1197, %v499
        %v1228 = vmul.f32 %v1212, %v500
        %v1229 = vrot.slane %v1117, 7
        %v1230 = vrot.slane %v1118, 7
        %v1231 = vrot.slane %v1119, 7
        %v1232 = vrot.slane %v1120, 7
        %v1233 = vrot.slane %v1121, 7
        %v1234 = vrot.slane %v1122, 7
        %v1235 = vrot.slane %v1123, 7
        %v1236 = vrot.slane %v1124, 7
        %v1237 = vrot.slane %v1125, 7
        %v1238 = vrot.slane %v1126, 7
        %v1239 = vrot.slane %v1127, 7
        %v1240 = vrot.slane %v1128, 7
        %v1241 = vrot.slane %v1129, 7
        %v1242 = vrot.slane %v1130, 7
        %v1243 = vrot.slane %v1131, 7
        %v1244 = vrot.slane %v1132, 7
        %v1245 = vsel %vm683, %v1243, %v1244
        %v1246 = vsel %vm683, %v1242, %v1243
        %v1247 = vsel %vm683, %v1241, %v1242
        %v1248 = vsel %vm683, %v1240, %v1241
        %v1249 = vsel %vm683, %v1239, %v1240
        %v1250 = vsel %vm683, %v1238, %v1239
        %v1251 = vsel %vm683, %v1237, %v1238
        %v1252 = vsel %vm683, %v1236, %v1237
        %v1253 = vsel %vm683, %v1235, %v1236
        %v1254 = vsel %vm683, %v1234, %v1235
        %v1255 = vsel %vm683, %v1233, %v1234
        %v1256 = vsel %vm683, %v1232, %v1233
        %v1257 = vsel %vm683, %v1231, %v1232
        %v1258 = vsel %vm683, %v1230, %v1231
        %v1259 = vsel %vm683, %v1229, %v1230
        %v1260 = vsel %vm683, %v1244, %v1229
        %v1261 = vmul.f32 %v1260, %v437
        %v1262 = vmul.f32 %v1259, %v438
        %v1263 = vmul.f32 %v1258, %v439
        %v1264 = vmul.f32 %v1257, %v440
        %v1265 = vmul.f32 %v1256, %v441
        %v1266 = vmul.f32 %v1255, %v442
        %v1267 = vmul.f32 %v1254, %v443
        %v1268 = vmul.f32 %v1253, %v444
        %v1269 = vmul.f32 %v1252, %v445
        %v1270 = vmul.f32 %v1251, %v446
        %v1271 = vmul.f32 %v1250, %v447
        %v1272 = vmul.f32 %v1249, %v448
        %v1273 = vmul.f32 %v1248, %v449
        %v1274 = vmul.f32 %v1247, %v450
        %v1275 = vmul.f32 %v1246, %v451
        %v1276 = vmul.f32 %v1245, %v452
        %v1277 = vrot.slane %v1117, 1
        %v1278 = vrot.slane %v1118, 1
        %v1279 = vrot.slane %v1119, 1
        %v1280 = vrot.slane %v1120, 1
        %v1281 = vrot.slane %v1121, 1
        %v1282 = vrot.slane %v1122, 1
        %v1283 = vrot.slane %v1123, 1
        %v1284 = vrot.slane %v1124, 1
        %v1285 = vrot.slane %v1125, 1
        %v1286 = vrot.slane %v1126, 1
        %v1287 = vrot.slane %v1127, 1
        %v1288 = vrot.slane %v1128, 1
        %v1289 = vrot.slane %v1129, 1
        %v1290 = vrot.slane %v1130, 1
        %v1291 = vrot.slane %v1131, 1
        %v1292 = vrot.slane %v1132, 1
        %v1293 = vsel %vm732, %v1291, %v1292
        %v1294 = vsel %vm732, %v1290, %v1291
        %v1295 = vsel %vm732, %v1289, %v1290
        %v1296 = vsel %vm732, %v1288, %v1289
        %v1297 = vsel %vm732, %v1287, %v1288
        %v1298 = vsel %vm732, %v1286, %v1287
        %v1299 = vsel %vm732, %v1285, %v1286
        %v1300 = vsel %vm732, %v1284, %v1285
        %v1301 = vsel %vm732, %v1283, %v1284
        %v1302 = vsel %vm732, %v1282, %v1283
        %v1303 = vsel %vm732, %v1281, %v1282
        %v1304 = vsel %vm732, %v1280, %v1281
        %v1305 = vsel %vm732, %v1279, %v1280
        %v1306 = vsel %vm732, %v1278, %v1279
        %v1307 = vsel %vm732, %v1277, %v1278
        %v1308 = vsel %vm732, %v1292, %v1277
        %v1309 = vmul.f32 %v1307, %v485
        %v1310 = vmul.f32 %v1306, %v486
        %v1311 = vmul.f32 %v1305, %v487
        %v1312 = vmul.f32 %v1304, %v488
        %v1313 = vmul.f32 %v1303, %v489
        %v1314 = vmul.f32 %v1302, %v490
        %v1315 = vmul.f32 %v1301, %v491
        %v1316 = vmul.f32 %v1300, %v492
        %v1317 = vmul.f32 %v1299, %v493
        %v1318 = vmul.f32 %v1298, %v494
        %v1319 = vmul.f32 %v1297, %v495
        %v1320 = vmul.f32 %v1296, %v496
        %v1321 = vmul.f32 %v1295, %v497
        %v1322 = vmul.f32 %v1294, %v498
        %v1323 = vmul.f32 %v1293, %v499
        %v1324 = vmul.f32 %v1308, %v500
        %v1325 = vmul.f32 %v1069, 2.0
        %v1326 = vmul.f32 %v1070, 2.0
        %v1327 = vmul.f32 %v1071, 2.0
        %v1328 = vmul.f32 %v1072, 2.0
        %v1329 = vmul.f32 %v1073, 2.0
        %v1330 = vmul.f32 %v1074, 2.0
        %v1331 = vmul.f32 %v1075, 2.0
        %v1332 = vmul.f32 %v1076, 2.0
        %v1333 = vmul.f32 %v1077, 2.0
        %v1334 = vmul.f32 %v1078, 2.0
        %v1335 = vmul.f32 %v1079, 2.0
        %v1336 = vmul.f32 %v1080, 2.0
        %v1337 = vmul.f32 %v1081, 2.0
        %v1338 = vmul.f32 %v1082, 2.0
        %v1339 = vmul.f32 %v1083, 2.0
        %v1340 = vmul.f32 %v1084, 2.0
        %v1341 = vadd.f32 %v1165, %v1325
        %v1342 = vadd.f32 %v1166, %v1326
        %v1343 = vadd.f32 %v1167, %v1327
        %v1344 = vadd.f32 %v1168, %v1328
        %v1345 = vadd.f32 %v1169, %v1329
        %v1346 = vadd.f32 %v1170, %v1330
        %v1347 = vadd.f32 %v1171, %v1331
        %v1348 = vadd.f32 %v1172, %v1332
        %v1349 = vadd.f32 %v1173, %v1333
        %v1350 = vadd.f32 %v1174, %v1334
        %v1351 = vadd.f32 %v1175, %v1335
        %v1352 = vadd.f32 %v1176, %v1336
        %v1353 = vadd.f32 %v1177, %v1337
        %v1354 = vadd.f32 %v1178, %v1338
        %v1355 = vadd.f32 %v1179, %v1339
        %v1356 = vadd.f32 %v1180, %v1340
        %v1357 = vadd.f32 %v1341, %v1213
        %v1358 = vadd.f32 %v1342, %v1214
        %v1359 = vadd.f32 %v1343, %v1215
        %v1360 = vadd.f32 %v1344, %v1216
        %v1361 = vadd.f32 %v1345, %v1217
        %v1362 = vadd.f32 %v1346, %v1218
        %v1363 = vadd.f32 %v1347, %v1219
        %v1364 = vadd.f32 %v1348, %v1220
        %v1365 = vadd.f32 %v1349, %v1221
        %v1366 = vadd.f32 %v1350, %v1222
        %v1367 = vadd.f32 %v1351, %v1223
        %v1368 = vadd.f32 %v1352, %v1224
        %v1369 = vadd.f32 %v1353, %v1225
        %v1370 = vadd.f32 %v1354, %v1226
        %v1371 = vadd.f32 %v1355, %v1227
        %v1372 = vadd.f32 %v1356, %v1228
        %v1373 = vsub.f32 %v1261, %v1309
        %v1374 = vsub.f32 %v1262, %v1310
        %v1375 = vsub.f32 %v1263, %v1311
        %v1376 = vsub.f32 %v1264, %v1312
        %v1377 = vsub.f32 %v1265, %v1313
        %v1378 = vsub.f32 %v1266, %v1314
        %v1379 = vsub.f32 %v1267, %v1315
        %v1380 = vsub.f32 %v1268, %v1316
        %v1381 = vsub.f32 %v1269, %v1317
        %v1382 = vsub.f32 %v1270, %v1318
        %v1383 = vsub.f32 %v1271, %v1319
        %v1384 = vsub.f32 %v1272, %v1320
        %v1385 = vsub.f32 %v1273, %v1321
        %v1386 = vsub.f32 %v1274, %v1322
        %v1387 = vsub.f32 %v1275, %v1323
        %v1388 = vsub.f32 %v1276, %v1324
        %v1389 = vand.u32 2147483647, %v1357
        %v1390 = vand.u32 2147483647, %v1358
        %v1391 = vand.u32 2147483647, %v1359
        %v1392 = vand.u32 2147483647, %v1360
        %v1393 = vand.u32 2147483647, %v1361
        %v1394 = vand.u32 2147483647, %v1362
        %v1395 = vand.u32 2147483647, %v1363
        %v1396 = vand.u32 2147483647, %v1364
        %v1397 = vand.u32 2147483647, %v1365
        %v1398 = vand.u32 2147483647, %v1366
        %v1399 = vand.u32 2147483647, %v1367
        %v1400 = vand.u32 2147483647, %v1368
        %v1401 = vand.u32 2147483647, %v1369
        %v1402 = vand.u32 2147483647, %v1370
        %v1403 = vand.u32 2147483647, %v1371
        %v1404 = vand.u32 2147483647, %v1372
        %v1405 = vand.u32 2147483647, %v1373
        %v1406 = vand.u32 2147483647, %v1374
        %v1407 = vand.u32 2147483647, %v1375
        %v1408 = vand.u32 2147483647, %v1376
        %v1409 = vand.u32 2147483647, %v1377
        %v1410 = vand.u32 2147483647, %v1378
        %v1411 = vand.u32 2147483647, %v1379
        %v1412 = vand.u32 2147483647, %v1380
        %v1413 = vand.u32 2147483647, %v1381
        %v1414 = vand.u32 2147483647, %v1382
        %v1415 = vand.u32 2147483647, %v1383
        %v1416 = vand.u32 2147483647, %v1384
        %v1417 = vand.u32 2147483647, %v1385
        %v1418 = vand.u32 2147483647, %v1386
        %v1419 = vand.u32 2147483647, %v1387
        %v1420 = vand.u32 2147483647, %v1388
        %v1421 = vadd.f32 %v1389, %v1405
        %v1422 = vadd.f32 %v1390, %v1406
        %v1423 = vadd.f32 %v1391, %v1407
        %v1424 = vadd.f32 %v1392, %v1408
        %v1425 = vadd.f32 %v1393, %v1409
        %v1426 = vadd.f32 %v1394, %v1410
        %v1427 = vadd.f32 %v1395, %v1411
        %v1428 = vadd.f32 %v1396, %v1412
        %v1429 = vadd.f32 %v1397, %v1413
        %v1430 = vadd.f32 %v1398, %v1414
        %v1431 = vadd.f32 %v1399, %v1415
        %v1432 = vadd.f32 %v1400, %v1416
        %v1433 = vadd.f32 %v1401, %v1417
        %v1434 = vadd.f32 %v1402, %v1418
        %v1435 = vadd.f32 %v1403, %v1419
        %v1436 = vadd.f32 %v1404, %v1420
        %v1437 = vmax.f32 %v957, %v1421
        %v1438 = vmax.f32 %v958, %v1422
        %v1439 = vmax.f32 %v959, %v1423
        %v1440 = vmax.f32 %v960, %v1424
        %v1441 = vmax.f32 %v961, %v1425
        %v1442 = vmax.f32 %v962, %v1426
        %v1443 = vmax.f32 %v963, %v1427
        %v1444 = vmax.f32 %v964, %v1428
        %v1445 = vmax.f32 %v965, %v1429
        %v1446 = vmax.f32 %v966, %v1430
        %v1447 = vmax.f32 %v967, %v1431
        %v1448 = vmax.f32 %v968, %v1432
        %v1449 = vmax.f32 %v969, %v1433
        %v1450 = vmax.f32 %v970, %v1434
        %v1451 = vmax.f32 %v971, %v1435
        %v1452 = vmax.f32 %v972, %v1436
        %1453 = vrot.lane.b32.xlu0 %v266, 1
        %v1454 = vpop.permute.xlu0 %1453
        %1455 = vrot.lane.b32.xlu0 %v267, 1
        %v1456 = vpop.permute.xlu0 %1455
        %1457 = vrot.lane.b32.xlu0 %v268, 1
        %v1458 = vpop.permute.xlu0 %1457
        %1459 = vrot.lane.b32.xlu0 %v269, 1
        %v1460 = vpop.permute.xlu0 %1459
        %1461 = vrot.lane.b32.xlu0 %v270, 1
        %v1462 = vpop.permute.xlu0 %1461
        %1463 = vrot.lane.b32.xlu0 %v271, 1
        %v1464 = vpop.permute.xlu0 %1463
        %1465 = vrot.lane.b32.xlu0 %v272, 1
        %v1466 = vpop.permute.xlu0 %1465
        %1467 = vrot.lane.b32.xlu0 %v273, 1
        %v1468 = vpop.permute.xlu0 %1467
        %1469 = vrot.lane.b32.xlu0 %v274, 1
        %v1470 = vpop.permute.xlu0 %1469
        %1471 = vrot.lane.b32.xlu0 %v275, 1
        %v1472 = vpop.permute.xlu0 %1471
        %1473 = vrot.lane.b32.xlu0 %v276, 1
        %v1474 = vpop.permute.xlu0 %1473
        %1475 = vrot.lane.b32.xlu0 %v277, 1
        %v1476 = vpop.permute.xlu0 %1475
        %1477 = vrot.lane.b32.xlu0 %v278, 1
        %v1478 = vpop.permute.xlu0 %1477
        %1479 = vrot.lane.b32.xlu0 %v279, 1
        %v1480 = vpop.permute.xlu0 %1479
        %1481 = vrot.lane.b32.xlu0 %v280, 1
        %v1482 = vpop.permute.xlu0 %1481
        %1483 = vrot.lane.b32.xlu0 %v281, 1
        %v1484 = vpop.permute.xlu0 %1483
        %v1485 = vmul.f32 %v1454, %v503
        %v1486 = vmul.f32 %v1456, %v503
        %v1487 = vmul.f32 %v1458, %v503
        %v1488 = vmul.f32 %v1460, %v503
        %v1489 = vmul.f32 %v1462, %v503
        %v1490 = vmul.f32 %v1464, %v503
        %v1491 = vmul.f32 %v1466, %v503
        %v1492 = vmul.f32 %v1468, %v503
        %v1493 = vmul.f32 %v1470, %v503
        %v1494 = vmul.f32 %v1472, %v503
        %v1495 = vmul.f32 %v1474, %v503
        %v1496 = vmul.f32 %v1476, %v503
        %v1497 = vmul.f32 %v1478, %v503
        %v1498 = vmul.f32 %v1480, %v503
        %v1499 = vmul.f32 %v1482, %v503
        %v1500 = vmul.f32 %v1484, %v503
        %1501 = vrot.lane.b32.xlu0 %v266, 127
        %v1502 = vpop.permute.xlu0 %1501
        %1503 = vrot.lane.b32.xlu0 %v267, 127
        %v1504 = vpop.permute.xlu0 %1503
        %1505 = vrot.lane.b32.xlu0 %v268, 127
        %v1506 = vpop.permute.xlu0 %1505
        %1507 = vrot.lane.b32.xlu0 %v269, 127
        %v1508 = vpop.permute.xlu0 %1507
        %1509 = vrot.lane.b32.xlu0 %v270, 127
        %v1510 = vpop.permute.xlu0 %1509
        %1511 = vrot.lane.b32.xlu0 %v271, 127
        %v1512 = vpop.permute.xlu0 %1511
        %1513 = vrot.lane.b32.xlu0 %v272, 127
        %v1514 = vpop.permute.xlu0 %1513
        %1515 = vrot.lane.b32.xlu0 %v273, 127
        %v1516 = vpop.permute.xlu0 %1515
        %1517 = vrot.lane.b32.xlu0 %v274, 127
        %v1518 = vpop.permute.xlu0 %1517
        %1519 = vrot.lane.b32.xlu0 %v275, 127
        %v1520 = vpop.permute.xlu0 %1519
        %1521 = vrot.lane.b32.xlu0 %v276, 127
        %v1522 = vpop.permute.xlu0 %1521
        %1523 = vrot.lane.b32.xlu0 %v277, 127
        %v1524 = vpop.permute.xlu0 %1523
        %1525 = vrot.lane.b32.xlu0 %v278, 127
        %v1526 = vpop.permute.xlu0 %1525
        %1527 = vrot.lane.b32.xlu0 %v279, 127
        %v1528 = vpop.permute.xlu0 %1527
        %1529 = vrot.lane.b32.xlu0 %v280, 127
        %v1530 = vpop.permute.xlu0 %1529
        %1531 = vrot.lane.b32.xlu0 %v281, 127
        %v1532 = vpop.permute.xlu0 %1531
        %v1533 = vmul.f32 %v1502, %v506
        %v1534 = vmul.f32 %v1504, %v506
        %v1535 = vmul.f32 %v1506, %v506
        %v1536 = vmul.f32 %v1508, %v506
        %v1537 = vmul.f32 %v1510, %v506
        %v1538 = vmul.f32 %v1512, %v506
        %v1539 = vmul.f32 %v1514, %v506
        %v1540 = vmul.f32 %v1516, %v506
        %v1541 = vmul.f32 %v1518, %v506
        %v1542 = vmul.f32 %v1520, %v506
        %v1543 = vmul.f32 %v1522, %v506
        %v1544 = vmul.f32 %v1524, %v506
        %v1545 = vmul.f32 %v1526, %v506
        %v1546 = vmul.f32 %v1528, %v506
        %v1547 = vmul.f32 %v1530, %v506
        %v1548 = vmul.f32 %v1532, %v506
        %v1549 = vsub.f32 %v1533, %v1485
        %v1550 = vsub.f32 %v1534, %v1486
        %v1551 = vsub.f32 %v1535, %v1487
        %v1552 = vsub.f32 %v1536, %v1488
        %v1553 = vsub.f32 %v1537, %v1489
        %v1554 = vsub.f32 %v1538, %v1490
        %v1555 = vsub.f32 %v1539, %v1491
        %v1556 = vsub.f32 %v1540, %v1492
        %v1557 = vsub.f32 %v1541, %v1493
        %v1558 = vsub.f32 %v1542, %v1494
        %v1559 = vsub.f32 %v1543, %v1495
        %v1560 = vsub.f32 %v1544, %v1496
        %v1561 = vsub.f32 %v1545, %v1497
        %v1562 = vsub.f32 %v1546, %v1498
        %v1563 = vsub.f32 %v1547, %v1499
        %v1564 = vsub.f32 %v1548, %v1500
        %v1565 = vmul.f32 %v266, 2.0
        %v1566 = vmul.f32 %v267, 2.0
        %v1567 = vmul.f32 %v268, 2.0
        %v1568 = vmul.f32 %v269, 2.0
        %v1569 = vmul.f32 %v270, 2.0
        %v1570 = vmul.f32 %v271, 2.0
        %v1571 = vmul.f32 %v272, 2.0
        %v1572 = vmul.f32 %v273, 2.0
        %v1573 = vmul.f32 %v274, 2.0
        %v1574 = vmul.f32 %v275, 2.0
        %v1575 = vmul.f32 %v276, 2.0
        %v1576 = vmul.f32 %v277, 2.0
        %v1577 = vmul.f32 %v278, 2.0
        %v1578 = vmul.f32 %v279, 2.0
        %v1579 = vmul.f32 %v280, 2.0
        %v1580 = vmul.f32 %v281, 2.0
        %v1581 = vadd.f32 %v1485, %v1565
        %v1582 = vadd.f32 %v1486, %v1566
        %v1583 = vadd.f32 %v1487, %v1567
        %v1584 = vadd.f32 %v1488, %v1568
        %v1585 = vadd.f32 %v1489, %v1569
        %v1586 = vadd.f32 %v1490, %v1570
        %v1587 = vadd.f32 %v1491, %v1571
        %v1588 = vadd.f32 %v1492, %v1572
        %v1589 = vadd.f32 %v1493, %v1573
        %v1590 = vadd.f32 %v1494, %v1574
        %v1591 = vadd.f32 %v1495, %v1575
        %v1592 = vadd.f32 %v1496, %v1576
        %v1593 = vadd.f32 %v1497, %v1577
        %v1594 = vadd.f32 %v1498, %v1578
        %v1595 = vadd.f32 %v1499, %v1579
        %v1596 = vadd.f32 %v1500, %v1580
        %v1597 = vadd.f32 %v1581, %v1533
        %v1598 = vadd.f32 %v1582, %v1534
        %v1599 = vadd.f32 %v1583, %v1535
        %v1600 = vadd.f32 %v1584, %v1536
        %v1601 = vadd.f32 %v1585, %v1537
        %v1602 = vadd.f32 %v1586, %v1538
        %v1603 = vadd.f32 %v1587, %v1539
        %v1604 = vadd.f32 %v1588, %v1540
        %v1605 = vadd.f32 %v1589, %v1541
        %v1606 = vadd.f32 %v1590, %v1542
        %v1607 = vadd.f32 %v1591, %v1543
        %v1608 = vadd.f32 %v1592, %v1544
        %v1609 = vadd.f32 %v1593, %v1545
        %v1610 = vadd.f32 %v1594, %v1546
        %v1611 = vadd.f32 %v1595, %v1547
        %v1612 = vadd.f32 %v1596, %v1548
        %v1613 = vrot.slane %v1549, 7
        %v1614 = vrot.slane %v1550, 7
        %v1615 = vrot.slane %v1551, 7
        %v1616 = vrot.slane %v1552, 7
        %v1617 = vrot.slane %v1553, 7
        %v1618 = vrot.slane %v1554, 7
        %v1619 = vrot.slane %v1555, 7
        %v1620 = vrot.slane %v1556, 7
        %v1621 = vrot.slane %v1557, 7
        %v1622 = vrot.slane %v1558, 7
        %v1623 = vrot.slane %v1559, 7
        %v1624 = vrot.slane %v1560, 7
        %v1625 = vrot.slane %v1561, 7
        %v1626 = vrot.slane %v1562, 7
        %v1627 = vrot.slane %v1563, 7
        %v1628 = vrot.slane %v1564, 7
        %v1629 = vsel %vm683, %v1627, %v1628
        %v1630 = vsel %vm683, %v1626, %v1627
        %v1631 = vsel %vm683, %v1625, %v1626
        %v1632 = vsel %vm683, %v1624, %v1625
        %v1633 = vsel %vm683, %v1623, %v1624
        %v1634 = vsel %vm683, %v1622, %v1623
        %v1635 = vsel %vm683, %v1621, %v1622
        %v1636 = vsel %vm683, %v1620, %v1621
        %v1637 = vsel %vm683, %v1619, %v1620
        %v1638 = vsel %vm683, %v1618, %v1619
        %v1639 = vsel %vm683, %v1617, %v1618
        %v1640 = vsel %vm683, %v1616, %v1617
        %v1641 = vsel %vm683, %v1615, %v1616
        %v1642 = vsel %vm683, %v1614, %v1615
        %v1643 = vsel %vm683, %v1613, %v1614
        %v1644 = vsel %vm683, %v1628, %v1613
        %v1645 = vmul.f32 %v1644, %v437
        %v1646 = vmul.f32 %v1643, %v438
        %v1647 = vmul.f32 %v1642, %v439
        %v1648 = vmul.f32 %v1641, %v440
        %v1649 = vmul.f32 %v1640, %v441
        %v1650 = vmul.f32 %v1639, %v442
        %v1651 = vmul.f32 %v1638, %v443
        %v1652 = vmul.f32 %v1637, %v444
        %v1653 = vmul.f32 %v1636, %v445
        %v1654 = vmul.f32 %v1635, %v446
        %v1655 = vmul.f32 %v1634, %v447
        %v1656 = vmul.f32 %v1633, %v448
        %v1657 = vmul.f32 %v1632, %v449
        %v1658 = vmul.f32 %v1631, %v450
        %v1659 = vmul.f32 %v1630, %v451
        %v1660 = vmul.f32 %v1629, %v452
        %v1661 = vrot.slane %v1549, 1
        %v1662 = vrot.slane %v1550, 1
        %v1663 = vrot.slane %v1551, 1
        %v1664 = vrot.slane %v1552, 1
        %v1665 = vrot.slane %v1553, 1
        %v1666 = vrot.slane %v1554, 1
        %v1667 = vrot.slane %v1555, 1
        %v1668 = vrot.slane %v1556, 1
        %v1669 = vrot.slane %v1557, 1
        %v1670 = vrot.slane %v1558, 1
        %v1671 = vrot.slane %v1559, 1
        %v1672 = vrot.slane %v1560, 1
        %v1673 = vrot.slane %v1561, 1
        %v1674 = vrot.slane %v1562, 1
        %v1675 = vrot.slane %v1563, 1
        %v1676 = vrot.slane %v1564, 1
        %v1677 = vsel %vm732, %v1675, %v1676
        %v1678 = vsel %vm732, %v1674, %v1675
        %v1679 = vsel %vm732, %v1673, %v1674
        %v1680 = vsel %vm732, %v1672, %v1673
        %v1681 = vsel %vm732, %v1671, %v1672
        %v1682 = vsel %vm732, %v1670, %v1671
        %v1683 = vsel %vm732, %v1669, %v1670
        %v1684 = vsel %vm732, %v1668, %v1669
        %v1685 = vsel %vm732, %v1667, %v1668
        %v1686 = vsel %vm732, %v1666, %v1667
        %v1687 = vsel %vm732, %v1665, %v1666
        %v1688 = vsel %vm732, %v1664, %v1665
        %v1689 = vsel %vm732, %v1663, %v1664
        %v1690 = vsel %vm732, %v1662, %v1663
        %v1691 = vsel %vm732, %v1661, %v1662
        %v1692 = vsel %vm732, %v1676, %v1661
        %v1693 = vmul.f32 %v1691, %v485
        %v1694 = vmul.f32 %v1690, %v486
        %v1695 = vmul.f32 %v1689, %v487
        %v1696 = vmul.f32 %v1688, %v488
        %v1697 = vmul.f32 %v1687, %v489
        %v1698 = vmul.f32 %v1686, %v490
        %v1699 = vmul.f32 %v1685, %v491
        %v1700 = vmul.f32 %v1684, %v492
        %v1701 = vmul.f32 %v1683, %v493
        %v1702 = vmul.f32 %v1682, %v494
        %v1703 = vmul.f32 %v1681, %v495
        %v1704 = vmul.f32 %v1680, %v496
        %v1705 = vmul.f32 %v1679, %v497
        %v1706 = vmul.f32 %v1678, %v498
        %v1707 = vmul.f32 %v1677, %v499
        %v1708 = vmul.f32 %v1692, %v500
        %v1709 = vrot.slane %v1597, 7
        %v1710 = vrot.slane %v1598, 7
        %v1711 = vrot.slane %v1599, 7
        %v1712 = vrot.slane %v1600, 7
        %v1713 = vrot.slane %v1601, 7
        %v1714 = vrot.slane %v1602, 7
        %v1715 = vrot.slane %v1603, 7
        %v1716 = vrot.slane %v1604, 7
        %v1717 = vrot.slane %v1605, 7
        %v1718 = vrot.slane %v1606, 7
        %v1719 = vrot.slane %v1607, 7
        %v1720 = vrot.slane %v1608, 7
        %v1721 = vrot.slane %v1609, 7
        %v1722 = vrot.slane %v1610, 7
        %v1723 = vrot.slane %v1611, 7
        %v1724 = vrot.slane %v1612, 7
        %v1725 = vsel %vm683, %v1723, %v1724
        %v1726 = vsel %vm683, %v1722, %v1723
        %v1727 = vsel %vm683, %v1721, %v1722
        %v1728 = vsel %vm683, %v1720, %v1721
        %v1729 = vsel %vm683, %v1719, %v1720
        %v1730 = vsel %vm683, %v1718, %v1719
        %v1731 = vsel %vm683, %v1717, %v1718
        %v1732 = vsel %vm683, %v1716, %v1717
        %v1733 = vsel %vm683, %v1715, %v1716
        %v1734 = vsel %vm683, %v1714, %v1715
        %v1735 = vsel %vm683, %v1713, %v1714
        %v1736 = vsel %vm683, %v1712, %v1713
        %v1737 = vsel %vm683, %v1711, %v1712
        %v1738 = vsel %vm683, %v1710, %v1711
        %v1739 = vsel %vm683, %v1709, %v1710
        %v1740 = vsel %vm683, %v1724, %v1709
        %v1741 = vmul.f32 %v1740, %v437
        %v1742 = vmul.f32 %v1739, %v438
        %v1743 = vmul.f32 %v1738, %v439
        %v1744 = vmul.f32 %v1737, %v440
        %v1745 = vmul.f32 %v1736, %v441
        %v1746 = vmul.f32 %v1735, %v442
        %v1747 = vmul.f32 %v1734, %v443
        %v1748 = vmul.f32 %v1733, %v444
        %v1749 = vmul.f32 %v1732, %v445
        %v1750 = vmul.f32 %v1731, %v446
        %v1751 = vmul.f32 %v1730, %v447
        %v1752 = vmul.f32 %v1729, %v448
        %v1753 = vmul.f32 %v1728, %v449
        %v1754 = vmul.f32 %v1727, %v450
        %v1755 = vmul.f32 %v1726, %v451
        %v1756 = vmul.f32 %v1725, %v452
        %v1757 = vrot.slane %v1597, 1
        %v1758 = vrot.slane %v1598, 1
        %v1759 = vrot.slane %v1599, 1
        %v1760 = vrot.slane %v1600, 1
        %v1761 = vrot.slane %v1601, 1
        %v1762 = vrot.slane %v1602, 1
        %v1763 = vrot.slane %v1603, 1
        %v1764 = vrot.slane %v1604, 1
        %v1765 = vrot.slane %v1605, 1
        %v1766 = vrot.slane %v1606, 1
        %v1767 = vrot.slane %v1607, 1
        %v1768 = vrot.slane %v1608, 1
        %v1769 = vrot.slane %v1609, 1
        %v1770 = vrot.slane %v1610, 1
        %v1771 = vrot.slane %v1611, 1
        %v1772 = vrot.slane %v1612, 1
        %v1773 = vsel %vm732, %v1771, %v1772
        %v1774 = vsel %vm732, %v1770, %v1771
        %v1775 = vsel %vm732, %v1769, %v1770
        %v1776 = vsel %vm732, %v1768, %v1769
        %v1777 = vsel %vm732, %v1767, %v1768
        %v1778 = vsel %vm732, %v1766, %v1767
        %v1779 = vsel %vm732, %v1765, %v1766
        %v1780 = vsel %vm732, %v1764, %v1765
        %v1781 = vsel %vm732, %v1763, %v1764
        %v1782 = vsel %vm732, %v1762, %v1763
        %v1783 = vsel %vm732, %v1761, %v1762
        %v1784 = vsel %vm732, %v1760, %v1761
        %v1785 = vsel %vm732, %v1759, %v1760
        %v1786 = vsel %vm732, %v1758, %v1759
        %v1787 = vsel %vm732, %v1757, %v1758
        %v1788 = vsel %vm732, %v1772, %v1757
        %v1789 = vmul.f32 %v1787, %v485
        %v1790 = vmul.f32 %v1786, %v486
        %v1791 = vmul.f32 %v1785, %v487
        %v1792 = vmul.f32 %v1784, %v488
        %v1793 = vmul.f32 %v1783, %v489
        %v1794 = vmul.f32 %v1782, %v490
        %v1795 = vmul.f32 %v1781, %v491
        %v1796 = vmul.f32 %v1780, %v492
        %v1797 = vmul.f32 %v1779, %v493
        %v1798 = vmul.f32 %v1778, %v494
        %v1799 = vmul.f32 %v1777, %v495
        %v1800 = vmul.f32 %v1776, %v496
        %v1801 = vmul.f32 %v1775, %v497
        %v1802 = vmul.f32 %v1774, %v498
        %v1803 = vmul.f32 %v1773, %v499
        %v1804 = vmul.f32 %v1788, %v500
        %v1805 = vmul.f32 %v1549, 2.0
        %v1806 = vmul.f32 %v1550, 2.0
        %v1807 = vmul.f32 %v1551, 2.0
        %v1808 = vmul.f32 %v1552, 2.0
        %v1809 = vmul.f32 %v1553, 2.0
        %v1810 = vmul.f32 %v1554, 2.0
        %v1811 = vmul.f32 %v1555, 2.0
        %v1812 = vmul.f32 %v1556, 2.0
        %v1813 = vmul.f32 %v1557, 2.0
        %v1814 = vmul.f32 %v1558, 2.0
        %v1815 = vmul.f32 %v1559, 2.0
        %v1816 = vmul.f32 %v1560, 2.0
        %v1817 = vmul.f32 %v1561, 2.0
        %v1818 = vmul.f32 %v1562, 2.0
        %v1819 = vmul.f32 %v1563, 2.0
        %v1820 = vmul.f32 %v1564, 2.0
        %v1821 = vadd.f32 %v1645, %v1805
        %v1822 = vadd.f32 %v1646, %v1806
        %v1823 = vadd.f32 %v1647, %v1807
        %v1824 = vadd.f32 %v1648, %v1808
        %v1825 = vadd.f32 %v1649, %v1809
        %v1826 = vadd.f32 %v1650, %v1810
        %v1827 = vadd.f32 %v1651, %v1811
        %v1828 = vadd.f32 %v1652, %v1812
        %v1829 = vadd.f32 %v1653, %v1813
        %v1830 = vadd.f32 %v1654, %v1814
        %v1831 = vadd.f32 %v1655, %v1815
        %v1832 = vadd.f32 %v1656, %v1816
        %v1833 = vadd.f32 %v1657, %v1817
        %v1834 = vadd.f32 %v1658, %v1818
        %v1835 = vadd.f32 %v1659, %v1819
        %v1836 = vadd.f32 %v1660, %v1820
        %v1837 = vadd.f32 %v1821, %v1693
        %v1838 = vadd.f32 %v1822, %v1694
        %v1839 = vadd.f32 %v1823, %v1695
        %v1840 = vadd.f32 %v1824, %v1696
        %v1841 = vadd.f32 %v1825, %v1697
        %v1842 = vadd.f32 %v1826, %v1698
        %v1843 = vadd.f32 %v1827, %v1699
        %v1844 = vadd.f32 %v1828, %v1700
        %v1845 = vadd.f32 %v1829, %v1701
        %v1846 = vadd.f32 %v1830, %v1702
        %v1847 = vadd.f32 %v1831, %v1703
        %v1848 = vadd.f32 %v1832, %v1704
        %v1849 = vadd.f32 %v1833, %v1705
        %v1850 = vadd.f32 %v1834, %v1706
        %v1851 = vadd.f32 %v1835, %v1707
        %v1852 = vadd.f32 %v1836, %v1708
        %v1853 = vsub.f32 %v1741, %v1789
        %v1854 = vsub.f32 %v1742, %v1790
        %v1855 = vsub.f32 %v1743, %v1791
        %v1856 = vsub.f32 %v1744, %v1792
        %v1857 = vsub.f32 %v1745, %v1793
        %v1858 = vsub.f32 %v1746, %v1794
        %v1859 = vsub.f32 %v1747, %v1795
        %v1860 = vsub.f32 %v1748, %v1796
        %v1861 = vsub.f32 %v1749, %v1797
        %v1862 = vsub.f32 %v1750, %v1798
        %v1863 = vsub.f32 %v1751, %v1799
        %v1864 = vsub.f32 %v1752, %v1800
        %v1865 = vsub.f32 %v1753, %v1801
        %v1866 = vsub.f32 %v1754, %v1802
        %v1867 = vsub.f32 %v1755, %v1803
        %v1868 = vsub.f32 %v1756, %v1804
        %v1869 = vand.u32 2147483647, %v1837
        %v1870 = vand.u32 2147483647, %v1838
        %v1871 = vand.u32 2147483647, %v1839
        %v1872 = vand.u32 2147483647, %v1840
        %v1873 = vand.u32 2147483647, %v1841
        %v1874 = vand.u32 2147483647, %v1842
        %v1875 = vand.u32 2147483647, %v1843
        %v1876 = vand.u32 2147483647, %v1844
        %v1877 = vand.u32 2147483647, %v1845
        %v1878 = vand.u32 2147483647, %v1846
        %v1879 = vand.u32 2147483647, %v1847
        %v1880 = vand.u32 2147483647, %v1848
        %v1881 = vand.u32 2147483647, %v1849
        %v1882 = vand.u32 2147483647, %v1850
        %v1883 = vand.u32 2147483647, %v1851
        %v1884 = vand.u32 2147483647, %v1852
        %v1885 = vand.u32 2147483647, %v1853
        %v1886 = vand.u32 2147483647, %v1854
        %v1887 = vand.u32 2147483647, %v1855
        %v1888 = vand.u32 2147483647, %v1856
        %v1889 = vand.u32 2147483647, %v1857
        %v1890 = vand.u32 2147483647, %v1858
        %v1891 = vand.u32 2147483647, %v1859
        %v1892 = vand.u32 2147483647, %v1860
        %v1893 = vand.u32 2147483647, %v1861
        %v1894 = vand.u32 2147483647, %v1862
        %v1895 = vand.u32 2147483647, %v1863
        %v1896 = vand.u32 2147483647, %v1864
        %v1897 = vand.u32 2147483647, %v1865
        %v1898 = vand.u32 2147483647, %v1866
        %v1899 = vand.u32 2147483647, %v1867
        %v1900 = vand.u32 2147483647, %v1868
        %v1901 = vadd.f32 %v1869, %v1885
        %v1902 = vadd.f32 %v1870, %v1886
        %v1903 = vadd.f32 %v1871, %v1887
        %v1904 = vadd.f32 %v1872, %v1888
        %v1905 = vadd.f32 %v1873, %v1889
        %v1906 = vadd.f32 %v1874, %v1890
        %v1907 = vadd.f32 %v1875, %v1891
        %v1908 = vadd.f32 %v1876, %v1892
        %v1909 = vadd.f32 %v1877, %v1893
        %v1910 = vadd.f32 %v1878, %v1894
        %v1911 = vadd.f32 %v1879, %v1895
        %v1912 = vadd.f32 %v1880, %v1896
        %v1913 = vadd.f32 %v1881, %v1897
        %v1914 = vadd.f32 %v1882, %v1898
        %v1915 = vadd.f32 %v1883, %v1899
        %v1916 = vadd.f32 %v1884, %v1900
        %v1917 = vsub.f32 %v1437, %v1901
        %v1918 = vsub.f32 %v1438, %v1902
        %v1919 = vsub.f32 %v1439, %v1903
        %v1920 = vsub.f32 %v1440, %v1904
        %v1921 = vsub.f32 %v1441, %v1905
        %v1922 = vsub.f32 %v1442, %v1906
        %v1923 = vsub.f32 %v1443, %v1907
        %v1924 = vsub.f32 %v1444, %v1908
        %v1925 = vsub.f32 %v1445, %v1909
        %v1926 = vsub.f32 %v1446, %v1910
        %v1927 = vsub.f32 %v1447, %v1911
        %v1928 = vsub.f32 %v1448, %v1912
        %v1929 = vsub.f32 %v1449, %v1913
        %v1930 = vsub.f32 %v1450, %v1914
        %v1931 = vsub.f32 %v1451, %v1915
        %v1932 = vsub.f32 %v1452, %v1916
        %v1933 = vand.u32 2147483647, %v1917
        %v1934 = vand.u32 2147483647, %v1918
        %v1935 = vand.u32 2147483647, %v1919
        %v1936 = vand.u32 2147483647, %v1920
        %v1937 = vand.u32 2147483647, %v1921
        %v1938 = vand.u32 2147483647, %v1922
        %v1939 = vand.u32 2147483647, %v1923
        %v1940 = vand.u32 2147483647, %v1924
        %v1941 = vand.u32 2147483647, %v1925
        %v1942 = vand.u32 2147483647, %v1926
        %v1943 = vand.u32 2147483647, %v1927
        %v1944 = vand.u32 2147483647, %v1928
        %v1945 = vand.u32 2147483647, %v1929
        %v1946 = vand.u32 2147483647, %v1930
        %v1947 = vand.u32 2147483647, %v1931
        %v1948 = vand.u32 2147483647, %v1932
        %v1949 = vadd.f32 %v1933, %v1934
        %v1950 = vadd.f32 %v1949, %v1935
        %v1951 = vadd.f32 %v1950, %v1936
        %v1952 = vadd.f32 %v1951, %v1937
        %v1953 = vadd.f32 %v1952, %v1938
        %v1954 = vadd.f32 %v1953, %v1939
        %v1955 = vadd.f32 %v1954, %v1940
        %v1956 = vadd.f32 %v1955, %v1941
        %v1957 = vadd.f32 %v1956, %v1942
        %v1958 = vadd.f32 %v1957, %v1943
        %v1959 = vadd.f32 %v1958, %v1944
        %v1960 = vadd.f32 %v1959, %v1945
        %v1961 = vadd.f32 %v1960, %v1946
        %v1962 = vadd.f32 %v1961, %v1947
        %v1963 = vadd.f32 %v1962, %v1948
        %1964 = vadd.xlane.f32.xlu0 %v1963
        %v1965 = vpop.xlane.xlu0 %1964
        %v1966 = vrot.slane %v1965, 4
        %v1967 = vadd.f32 %v1965, %v1966
        %v1968 = vrot.slane %v1967, 2
        %v1969 = vadd.f32 %v1967, %v1968
        %v1970 = vrot.slane %v1969, 1
        %v1971 = vadd.f32 %v1969, %v1970
        %s1972 = vtos %v1971
        %vm1973 = vcmp.eq.s32.totalorder %v404, 0
        %v1974 = vstv %s385
        %v1975 = vstv %s1972
        %v1976 = vsel %vm1973, %v1974, %v1975
        %vm1977 = vcmp.eq.s32.totalorder %v387, 0
        %vm1978 = vcmp.lt.s32.totalorder %v404, 2
        %vm1979 = vmand %vm1977, %vm1978
        %v1980 = vsel %vm1979, %v1976, 0.0
        %1981 = vst [vmem:[%s265] sm:$0xff] %v1980
        %s1982 = sand.u32 %s109, 1
        %s1983 = scalar_lea.sflag [#allocation4], %s1982
        %s1984 = sand.u32 %s109, 1
        %s1985 = smul.addr %s1984, 8
        %s1986 = scalar_lea.vmem [#allocation8], %s1985
        // Predicated region
        $region45: #{tpu_custom_call.1} parent=31 // pred_check
          %p1987 = pneg %p119
        $region46: #{tpu_custom_call.1} parent=31 // pred_check_branch
          %1989 = sbr.rel (%p1987) target = $region48
        $region47: #{tpu_custom_call.1} parent=31 // pred_region
          %s1991 = ssub.s32 128, 128
          %1992 = vsyncadd %s1983, %s1991
          %s1993 = smul.addr %s23, 128
          %s1994 = scalar_lea.hbm %s3, %s1993
          %s1996 = sshll.u32 %s1986, 4
          %s1997 = int_to_ptr.vmem [resolvable:$true] %s1996
          %1999 = dma.vmem_to_hbm [thread:$0]  %s1997, 128, %s1994, %s1983
        $region48: #{tpu_custom_call.1} parent=31 // pred_fallthru
          _
      $region32: #{tpu_custom_call.1} parent=5 // pred_fallthru
        _
      %p2000 = scmp.le.s32.totalorder 2, %s18
      // Predicated region
      $region49: #{tpu_custom_call.1} parent=5 // pred_check
        %p2001 = pneg %p2000
      $region50: #{tpu_custom_call.1} parent=5 // pred_check_branch
        %2003 = sbr.rel (%p2001) target = $region52
      $region51: #{tpu_custom_call.1} parent=5 // pred_region
        %s2004 = ssub.s32 %s18, 2
        // Predicated region
        $region53: #{tpu_custom_call.1} parent=51 // pred_check
          %p2005 = pneg %p125
        $region54: #{tpu_custom_call.1} parent=51 // pred_check_branch
          %2007 = sbr.rel (%p2005) target = $region56
        $region55: #{tpu_custom_call.1} parent=51 // pred_region
          %s2008 = sand.u32 %s110, 1
          %s2009 = scalar_lea.sflag [#allocation4], %s2008
          %s2010 = sand.u32 %s110, 1
          %s2011 = smul.addr %s2010, 8
          %s2012 = scalar_lea.vmem [#allocation8], %s2011
          %2013 = dma.done %s2009, 128
        $region56: #{tpu_custom_call.1} parent=51 // pred_fallthru
          _
      $region52: #{tpu_custom_call.1} parent=5 // pred_fallthru
        _
    $region6: #{tpu_custom_call.1} parent=1 // loop_footer
      %s22 = sadd.s32 1, %s18
    $region7: #{tpu_custom_call.1} parent=1 // loop_footer_branch
      %17 = sbr.rel target = $region3
    $region8: #{tpu_custom_call.1} parent=1 // loop_exit
      _
    %2014 = vsyncpa [#allocation3], 1
    %s2015 = scalar_lea.sflag [#allocation3], 1
    %2016 = vsyncpa %s2015, 1
    %2017 = vsyncpa [#allocation6], 1
    %s2018 = scalar_lea.sflag [#allocation6], 1
    %2019 = vsyncpa %s2018, 1
    %2020 = vsyncpa [#allocation4], 1
    %s2021 = scalar_lea.sflag [#allocation4], 1
    %2022 = vsyncpa %s2021, 1

</llo_original>
